<compile_context>
chip_gen: v7x
topology: tpu7x:2x2x1
jax: 0.10.0
libtpu: 0.0.40
codegen_flags: <defaults>
</compile_context>

<pallas_src>
import functools

import numpy as np
import jax
import jax.numpy as jnp
from jax.experimental import pallas as pl
from jax.experimental.pallas import tpu as pltpu

# ------------------------- model hyper-parameters -------------------------
FEAT_DIM = 4                      # cmd_args.feat_dim
LATENT_DIMS = (32, 32, 32, 1)     # cmd_args.latent_dim (DGCNN default)
TOTAL_LATENT = sum(LATENT_DIMS)   # 97
PAD_LATENT = 128                  # lane-pad 97 -> 128: lane-dense stores / GEMM K-dim
SORT_K = 10                       # cmd_args.sortpooling_k
CONV1_OUT = 16                    # Conv1d(1, 16, k=TOTAL_LATENT, stride=TOTAL_LATENT)
CONV2_OUT = 32                    # Conv1d(16, 32, 5)
CONV2_K = 5
HIDDEN = 32                       # cmd_args.hidden
NUM_CLASS = 2                     # cmd_args.num_class
DENSE_DIM = ((SORT_K // 2) - CONV2_K + 1) * CONV2_OUT  # DGCNN.dense_dim (out_dim == 0)


def _vmem():
    # Everything is tiny (< 100 KiB total): whole-array VMEM residency, no grid.
    # TODO(synk): for large N / batch, row-tile A_hat with a BlockSpec grid and add a
    # "parallel" batch axis so v7x's two TensorCores are both used.
    return pl.BlockSpec(memory_space=pltpu.MemorySpace.VMEM)


# ------------------------- kernel 1: fused 4-layer graph conv -------------------------
def _gconv_fused_kernel(a_ref, x_ref, dinv_ref,
                        w1_ref, b1_ref, w2_ref, b2_ref, w3_ref, b3_ref,
                        w4r_ref, b4_ref, o_ref):
    # Each layer: h_out = tanh( deg^-1 * ((A + I) @ h_in @ W + b) )  (DGCNN mean-field)
    a = a_ref[...]
    dinv = dinv_ref[...]

    def layer(h, w, b):
        msg = jnp.dot(a, h, preferred_element_type=jnp.float32)
        z = jnp.dot(msg, w, preferred_element_type=jnp.float32) + b
        return jnp.tanh(z * dinv)

    h1 = layer(x_ref[...], w1_ref[...], b1_ref[...])     # (N, 32)
    h2 = layer(h1, w2_ref[...], b2_ref[...])             # (N, 32)
    h3 = layer(h2, w3_ref[...], b3_ref[...])             # (N, 32)

    # Last layer has a single output channel -> VPU row-dot (avoids a 1-column MXU pass).
    msg4 = jnp.dot(a, h3, preferred_element_type=jnp.float32)                # (N, 32)
    z4 = jnp.sum(msg4 * w4r_ref[...], axis=-1, keepdims=True) + b4_ref[...]  # (N, 1)
    h4 = jnp.tanh(z4 * dinv)                                                 # (N, 1)

    # Build one lane-dense (N, 128) slab: [h1 | h2 | h3 | h4, zeros(31)] and write it
    # with a single unmasked 128-lane store.
    n = o_ref.shape[0]
    tail_w = o_ref.shape[1] - 3 * LATENT_DIMS[0]                             # 32 lanes
    lane = jax.lax.broadcasted_iota(jnp.int32, (n, tail_w), 1)
    h4_blk = jnp.where(lane == 0, h4, 0.0)                                   # (N, 32)
    o_ref[...] = jnp.concatenate([h1, h2, h3, h4_blk], axis=-1)              # (N, 128)


def gconv_stack(a_hat, deg_inv, node_feat, gconv_params):
    (w1, b1), (w2, b2), (w3, b3), (w4, b4) = gconv_params
    # w4 is (32, 1) -> row-vector (1, 32) so the last layer is a broadcast-mul + lane reduce.
    w4r = w4.reshape(1, w4.shape[0])
    n = a_hat.shape[0]
    return pl.pallas_call(
        _gconv_fused_kernel,
        out_shape=jax.ShapeDtypeStruct((n, PAD_LATENT), jnp.float32),
        in_specs=[_vmem()] * 11,
        out_specs=_vmem(),
    )(a_hat, node_feat, deg_inv, w1, b1, w2, b2, w3, b3, w4r, b4)


# ------------------------- kernel 2: conv1 -> maxpool -> conv2 -> MLP -> NLL -------------------------
def _head_kernel(pooled_ref, c1w_ref, c1b_ref, c2w_ref, c2b_ref,
                 w1_ref, b1_ref, w2_ref, b2_ref, lab_ref,
                 logp_ref, loss_ref):
    bsz, k, _ = pooled_ref.shape
    half = k // 2
    out_len = half - CONV2_K + 1           # == 1 for the default config
    c1w = c1w_ref[...]                     # (128, 16), rows 97..127 are zero
    c1b = c1b_ref[...]                     # (1, 16)
    c2b = c2b_ref[...]                     # (1, 32)

    dense_rows = []
    for b in range(bsz):                   # static unroll over the (tiny) batch
        xb = pooled_ref[b]                 # (k, 128) lane-dense slab for graph b
        # Conv1d(1, 16, k=97, stride=97): a per-row linear over the padded 128 lanes.
        cb = jnp.maximum(
            jnp.dot(xb, c1w, preferred_element_type=jnp.float32) + c1b, 0.0)  # (k, 16)
        # MaxPool1d(2, 2) over the position axis.
        p1 = [jnp.maximum(cb[2 * p:2 * p + 1, :], cb[2 * p + 1:2 * p + 2, :])
              for p in range(half)]        # list of (1, 16)
        # Conv1d(16, 32, 5): per output position, sum of 5 small matmuls
        # (weights pre-split per kernel-tap, channel-major matches PyTorch reshape).
        cols = []
        for o in range(out_len):
            acc = c2b
            for j in range(CONV2_K):
                acc = acc + jnp.dot(p1[o + j], c2w_ref[j],
                                    preferred_element_type=jnp.float32)    # (1, 32)
            cols.append(jnp.maximum(acc, 0.0))
        dense_rows.append(cols[0] if out_len == 1 else jnp.concatenate(cols, axis=1))
    dense = dense_rows[0] if bsz == 1 else jnp.concatenate(dense_rows, axis=0)  # (B, DENSE_DIM)
    dense = jnp.maximum(dense, 0.0)        # conv1d_activation re-applied to to_dense (idempotent)

    # MLPClassifier: Linear -> ReLU -> Linear -> log_softmax; mean NLL over the batch.
    h = jnp.maximum(
        jnp.dot(dense, w1_ref[...], preferred_element_type=jnp.float32) + b1_ref[...], 0.0)
    logits = jnp.dot(h, w2_ref[...], preferred_element_type=jnp.float32) + b2_ref[...]
    m = jnp.max(logits, axis=-1, keepdims=True)
    lse = jnp.log(jnp.sum(jnp.exp(logits - m), axis=-1, keepdims=True)) + m
    logp = logits - lse
    logp_ref[...] = logp

    cls = jax.lax.broadcasted_iota(jnp.int32, logp.shape, 1)
    picked = jnp.where(cls == lab_ref[...], logp, 0.0)          # select logp[b, label_b]
    nll = -jnp.sum(picked, axis=-1, keepdims=True)              # (B, 1)
    loss_ref[...] = jnp.sum(nll, axis=0, keepdims=True) / bsz   # (1, 1)


def head_forward(pooled, params, labels):
    bsz = pooled.shape[0]
    labels2d = labels.reshape(bsz, 1).astype(jnp.int32)
    logp, loss = pl.pallas_call(
        _head_kernel,
        out_shape=(jax.ShapeDtypeStruct((bsz, NUM_CLASS), jnp.float32),
                   jax.ShapeDtypeStruct((1, 1), jnp.float32)),
        in_specs=[_vmem()] * 10,
        out_specs=(_vmem(), _vmem()),
    )(pooled, params["conv1_w"], params["conv1_b"],
      params["conv2_w_stack"], params["conv2_b"],
      params["mlp_w1"], params["mlp_b1"], params["mlp_w2"], params["mlp_b2"],
      labels2d)
    return logp, loss[0, 0]


# ------------------------- JAX glue: vectorized SortPooling -------------------------
def sort_pooling(h_pad, graph_sizes, k):
    # SortPooling: per graph, sort nodes by the last latent channel (descending),
    # keep top-k rows, zero-pad if the graph is smaller than k.
    # TODO(synk): data-dependent sort kept in JAX glue (no clean Pallas sort primitive);
    #             assumes static, equal graph sizes so it is one fused top_k + gather.
    n = graph_sizes[0]
    assert all(g == n for g in graph_sizes), "equal static graph sizes expected"
    bsz = len(graph_sizes)
    hb = h_pad.reshape(bsz, n, h_pad.shape[1])               # (B, n, 128)
    key = hb[:, :, TOTAL_LATENT - 1]                         # sort channel = last latent dim
    kk = min(k, n)
    _, idx = jax.lax.top_k(key, kk)                          # (B, kk), descending
    topk = jnp.take_along_axis(hb, idx[:, :, None], axis=1)  # (B, kk, 128)
    if kk < k:
        topk = jnp.concatenate(
            [topk, jnp.zeros((bsz, k - kk, hb.shape[2]), jnp.float32)], axis=1)
    return topk                                              # (B, k, 128)


def classifier_forward(params, a_hat, deg_inv, node_feat, labels, *, graph_sizes):
    h_pad = gconv_stack(a_hat, deg_inv, node_feat, params["gconv"])   # (N, 128)
    pooled = sort_pooling(h_pad, graph_sizes, SORT_K)                 # (B, k, 128)
    return head_forward(pooled, params, labels)


# ------------------------- deterministic parameter init -------------------------
def _init_linear(key, fan_in, fan_out):
    k1, k2 = jax.random.split(key)
    bound = 1.0 / np.sqrt(fan_in)
    w = jax.random.uniform(k1, (fan_in, fan_out), jnp.float32, -bound, bound)
    b = jax.random.uniform(k2, (1, fan_out), jnp.float32, -bound, bound)
    return w, b


def build_params(key):
    keys = jax.random.split(key, 8)
    params = {}
    gconv, fin = [], FEAT_DIM
    for i, fout in enumerate(LATENT_DIMS):
        gconv.append(_init_linear(keys[i], fin, fout))
        fin = fout
    params["gconv"] = gconv
    # Conv1d(1, 16, 97) -> weight (16,1,97) reshaped to (97,16), zero-padded to 128 rows
    # so the pooled slab's padded lanes 97..127 contribute nothing.
    w1c, b1c = _init_linear(keys[4], TOTAL_LATENT, CONV1_OUT)
    params["conv1_w"] = jnp.pad(w1c, ((0, PAD_LATENT - TOTAL_LATENT), (0, 0)))
    params["conv1_b"] = b1c
    # Conv1d(16, 32, 5) -> weight (32,16,5) as (80,32) channel-major; pre-split per
    # kernel tap into a (5, 16, 32) stack so the kernel needs no in-kernel transpose.
    w2c, b2c = _init_linear(keys[5], CONV1_OUT * CONV2_K, CONV2_OUT)
    params["conv2_w_stack"] = w2c.reshape(CONV1_OUT, CONV2_K, CONV2_OUT).transpose(1, 0, 2)
    params["conv2_b"] = b2c
    params["mlp_w1"], params["mlp_b1"] = _init_linear(keys[6], DENSE_DIM, HIDDEN)
    params["mlp_w2"], params["mlp_b2"] = _init_linear(keys[7], HIDDEN, NUM_CLASS)
    return params


def build_graph_batch(key, graph_sizes):
    # Deterministic toy batch: ring graphs, random node features, labels [0,1,...].
    n_total = sum(graph_sizes)
    a = np.zeros((n_total, n_total), np.float32)
    off = 0
    for n in graph_sizes:
        for i in range(n):
            a[off + i, off + (i + 1) % n] = 1.0
            a[off + i, off + (i - 1) % n] = 1.0
        off += n
    a_hat = a + np.eye(n_total, dtype=np.float32)            # A + I (self loops)
    deg_inv = (1.0 / a_hat.sum(axis=1, keepdims=True)).astype(np.float32)
    node_feat = jax.random.normal(key, (n_total, FEAT_DIM), jnp.float32)
    labels = jnp.arange(len(graph_sizes), dtype=jnp.int32) % NUM_CLASS
    return jnp.asarray(a_hat), jnp.asarray(deg_inv), node_feat, labels


if __name__ == "__main__":
    key = jax.random.PRNGKey(0)
    k_param, k_feat = jax.random.split(key)

    graph_sizes = (16, 16)                                   # batch of 2 graphs
    a_hat, deg_inv, node_feat, labels = build_graph_batch(k_feat, graph_sizes)
    params = build_params(k_param)

    fwd = jax.jit(functools.partial(classifier_forward, graph_sizes=graph_sizes))
    logp, loss = fwd(params, a_hat, deg_inv, node_feat, labels)
    jax.block_until_ready((logp, loss))

    assert logp.shape == (len(graph_sizes), NUM_CLASS)
    assert np.isfinite(np.asarray(loss))
    print("KERNEL_OK")
</pallas_src>

<mosaic_0001>
module attributes {stable_mosaic.version = 11 : i64} {
  func.func @_gconv_fused_kernel(%arg0: memref<32x32xf32, #tpu.memory_space<vmem>>, %arg1: memref<32x4xf32, #tpu.memory_space<vmem>>, %arg2: memref<32x1xf32, #tpu.memory_space<vmem>>, %arg3: memref<4x32xf32, #tpu.memory_space<vmem>>, %arg4: memref<1x32xf32, #tpu.memory_space<vmem>>, %arg5: memref<32x32xf32, #tpu.memory_space<vmem>>, %arg6: memref<1x32xf32, #tpu.memory_space<vmem>>, %arg7: memref<32x32xf32, #tpu.memory_space<vmem>>, %arg8: memref<1x32xf32, #tpu.memory_space<vmem>>, %arg9: memref<1x32xf32, #tpu.memory_space<vmem>>, %arg10: memref<1x1xf32, #tpu.memory_space<vmem>>, %arg11: memref<32x128xf32, #tpu.memory_space<vmem>>) attributes {dimension_semantics = [], scalar_prefetch = 0 : i64, scratch_operands = 0 : i64, tpu.core_type = #tpu.core_type<tc>} {
    %c0 = arith.constant 0 : index
    %c0_0 = arith.constant 0 : index
    %0 = vector.load %arg0[%c0, %c0_0] : memref<32x32xf32, #tpu.memory_space<vmem>>, vector<32x32xf32>
    %c0_1 = arith.constant 0 : index
    %c0_2 = arith.constant 0 : index
    %1 = vector.load %arg2[%c0_1, %c0_2] : memref<32x1xf32, #tpu.memory_space<vmem>>, vector<32x1xf32>
    %c0_3 = arith.constant 0 : index
    %c0_4 = arith.constant 0 : index
    %2 = vector.load %arg1[%c0_3, %c0_4] : memref<32x4xf32, #tpu.memory_space<vmem>>, vector<32x4xf32>
    %c0_5 = arith.constant 0 : index
    %c0_6 = arith.constant 0 : index
    %3 = vector.load %arg3[%c0_5, %c0_6] : memref<4x32xf32, #tpu.memory_space<vmem>>, vector<4x32xf32>
    %c0_7 = arith.constant 0 : index
    %c0_8 = arith.constant 0 : index
    %4 = vector.load %arg4[%c0_7, %c0_8] : memref<1x32xf32, #tpu.memory_space<vmem>>, vector<1x32xf32>
    %cst = arith.constant dense<0.000000e+00> : vector<32x4xf32>
    %5 = tpu.matmul %0, %2, %cst {dimension_numbers = #tpu.dot_dimension_numbers<[1], [0], [0], [1], [0, 0, 1, 1], [], []>} : vector<32x32xf32>, vector<32x4xf32>, vector<32x4xf32> -> vector<32x4xf32>
    %cst_9 = arith.constant dense<0.000000e+00> : vector<32x32xf32>
    %6 = tpu.matmul %5, %3, %cst_9 {dimension_numbers = #tpu.dot_dimension_numbers<[1], [0], [0], [1], [0, 0, 1, 1], [], []>} : vector<32x4xf32>, vector<4x32xf32>, vector<32x32xf32> -> vector<32x32xf32>
    %7 = vector.broadcast %4 : vector<1x32xf32> to vector<32x32xf32>
    %8 = arith.addf %6, %7 : vector<32x32xf32>
    %9 = vector.broadcast %1 : vector<32x1xf32> to vector<32x32xf32>
    %10 = arith.mulf %8, %9 : vector<32x32xf32>
    %11 = math.tanh %10 : vector<32x32xf32>
    %c0_10 = arith.constant 0 : index
    %c0_11 = arith.constant 0 : index
    %12 = vector.load %arg5[%c0_10, %c0_11] : memref<32x32xf32, #tpu.memory_space<vmem>>, vector<32x32xf32>
    %c0_12 = arith.constant 0 : index
    %c0_13 = arith.constant 0 : index
    %13 = vector.load %arg6[%c0_12, %c0_13] : memref<1x32xf32, #tpu.memory_space<vmem>>, vector<1x32xf32>
    %cst_14 = arith.constant dense<0.000000e+00> : vector<32x32xf32>
    %14 = tpu.matmul %0, %11, %cst_14 {dimension_numbers = #tpu.dot_dimension_numbers<[1], [0], [0], [1], [0, 0, 1, 1], [], []>} : vector<32x32xf32>, vector<32x32xf32>, vector<32x32xf32> -> vector<32x32xf32>
    %cst_15 = arith.constant dense<0.000000e+00> : vector<32x32xf32>
    %15 = tpu.matmul %14, %12, %cst_15 {dimension_numbers = #tpu.dot_dimension_numbers<[1], [0], [0], [1], [0, 0, 1, 1], [], []>} : vector<32x32xf32>, vector<32x32xf32>, vector<32x32xf32> -> vector<32x32xf32>
    %16 = vector.broadcast %13 : vector<1x32xf32> to vector<32x32xf32>
    %17 = arith.addf %15, %16 : vector<32x32xf32>
    %18 = vector.broadcast %1 : vector<32x1xf32> to vector<32x32xf32>
    %19 = arith.mulf %17, %18 : vector<32x32xf32>
    %20 = math.tanh %19 : vector<32x32xf32>
    %c0_16 = arith.constant 0 : index
    %c0_17 = arith.constant 0 : index
    %21 = vector.load %arg7[%c0_16, %c0_17] : memref<32x32xf32, #tpu.memory_space<vmem>>, vector<32x32xf32>
    %c0_18 = arith.constant 0 : index
    %c0_19 = arith.constant 0 : index
    %22 = vector.load %arg8[%c0_18, %c0_19] : memref<1x32xf32, #tpu.memory_space<vmem>>, vector<1x32xf32>
    %cst_20 = arith.constant dense<0.000000e+00> : vector<32x32xf32>
    %23 = tpu.matmul %0, %20, %cst_20 {dimension_numbers = #tpu.dot_dimension_numbers<[1], [0], [0], [1], [0, 0, 1, 1], [], []>} : vector<32x32xf32>, vector<32x32xf32>, vector<32x32xf32> -> vector<32x32xf32>
    %cst_21 = arith.constant dense<0.000000e+00> : vector<32x32xf32>
    %24 = tpu.matmul %23, %21, %cst_21 {dimension_numbers = #tpu.dot_dimension_numbers<[1], [0], [0], [1], [0, 0, 1, 1], [], []>} : vector<32x32xf32>, vector<32x32xf32>, vector<32x32xf32> -> vector<32x32xf32>
    %25 = vector.broadcast %22 : vector<1x32xf32> to vector<32x32xf32>
    %26 = arith.addf %24, %25 : vector<32x32xf32>
    %27 = vector.broadcast %1 : vector<32x1xf32> to vector<32x32xf32>
    %28 = arith.mulf %26, %27 : vector<32x32xf32>
    %29 = math.tanh %28 : vector<32x32xf32>
    %cst_22 = arith.constant dense<0.000000e+00> : vector<32x32xf32>
    %30 = tpu.matmul %0, %29, %cst_22 {dimension_numbers = #tpu.dot_dimension_numbers<[1], [0], [0], [1], [0, 0, 1, 1], [], []>} : vector<32x32xf32>, vector<32x32xf32>, vector<32x32xf32> -> vector<32x32xf32>
    %c0_23 = arith.constant 0 : index
    %c0_24 = arith.constant 0 : index
    %31 = vector.load %arg9[%c0_23, %c0_24] : memref<1x32xf32, #tpu.memory_space<vmem>>, vector<1x32xf32>
    %32 = vector.broadcast %31 : vector<1x32xf32> to vector<32x32xf32>
    %33 = arith.mulf %30, %32 : vector<32x32xf32>
    %cst_25 = arith.constant dense<0.000000e+00> : vector<32xf32>
    %34 = vector.multi_reduction <add>, %33, %cst_25 [1] : vector<32x32xf32> to vector<32xf32>
    %35 = vector.shape_cast %34 : vector<32xf32> to vector<32x1xf32>
    %c0_26 = arith.constant 0 : index
    %c0_27 = arith.constant 0 : index
    %36 = vector.load %arg10[%c0_26, %c0_27] : memref<1x1xf32, #tpu.memory_space<vmem>>, vector<1x1xf32>
    %37 = vector.broadcast %36 : vector<1x1xf32> to vector<32x1xf32>
    %38 = arith.addf %35, %37 : vector<32x1xf32>
    %39 = arith.mulf %38, %1 : vector<32x1xf32>
    %40 = math.tanh %39 : vector<32x1xf32>
    %41 = tpu.iota {dimensions = array<i32: 1>} : vector<32x32xi32>
    %c0_i32 = arith.constant 0 : i32
    %42 = vector.broadcast %c0_i32 : i32 to vector<32x32xi32>
    %43 = arith.cmpi eq, %41, %42 : vector<32x32xi32>
    %cst_28 = arith.constant 0.000000e+00 : f32
    %44 = vector.shape_cast %40 : vector<32x1xf32> to vector<32x1xf32>
    %45 = vector.broadcast %44 : vector<32x1xf32> to vector<32x32xf32>
    %46 = vector.broadcast %cst_28 : f32 to vector<32x32xf32>
    %47 = arith.select %43, %45, %46 : vector<32x32xi1>, vector<32x32xf32>
    %48 = tpu.concatenate %11, %20, %29, %47 in 1 : vector<32x32xf32>, vector<32x32xf32>, vector<32x32xf32>, vector<32x32xf32> -> vector<32x128xf32>
    %c0_29 = arith.constant 0 : index
    %c0_30 = arith.constant 0 : index
    %49 = vector.load %arg11[%c0_29, %c0_30] : memref<32x128xf32, #tpu.memory_space<vmem>>, vector<32x128xf32>
    tpu.vector_store %arg11[%c0_29, %c0_30], %48 {strides = array<i32>} : memref<32x128xf32, #tpu.memory_space<vmem>>, vector<32x128xf32>,
    return
  }
}

module attributes {stable_mosaic.version = 11 : i64} {
  func.func @_head_kernel(%arg0: memref<2x10x128xf32, #tpu.memory_space<vmem>>, %arg1: memref<128x16xf32, #tpu.memory_space<vmem>>, %arg2: memref<1x16xf32, #tpu.memory_space<vmem>>, %arg3: memref<5x16x32xf32, #tpu.memory_space<vmem>>, %arg4: memref<1x32xf32, #tpu.memory_space<vmem>>, %arg5: memref<32x32xf32, #tpu.memory_space<vmem>>, %arg6: memref<1x32xf32, #tpu.memory_space<vmem>>, %arg7: memref<32x2xf32, #tpu.memory_space<vmem>>, %arg8: memref<1x2xf32, #tpu.memory_space<vmem>>, %arg9: memref<2x1xi32, #tpu.memory_space<vmem>>, %arg10: memref<2x2xf32, #tpu.memory_space<vmem>>, %arg11: memref<1x1xf32, #tpu.memory_space<vmem>>) attributes {dimension_semantics = [], scalar_prefetch = 0 : i64, scratch_operands = 0 : i64, tpu.core_type = #tpu.core_type<tc>} {
    %c0 = arith.constant 0 : index
    %c0_0 = arith.constant 0 : index
    %0 = vector.load %arg1[%c0, %c0_0] : memref<128x16xf32, #tpu.memory_space<vmem>>, vector<128x16xf32>
    %c0_1 = arith.constant 0 : index
    %c0_2 = arith.constant 0 : index
    %1 = vector.load %arg2[%c0_1, %c0_2] : memref<1x16xf32, #tpu.memory_space<vmem>>, vector<1x16xf32>
    %c0_3 = arith.constant 0 : index
    %c0_4 = arith.constant 0 : index
    %2 = vector.load %arg4[%c0_3, %c0_4] : memref<1x32xf32, #tpu.memory_space<vmem>>, vector<1x32xf32>
    %c0_5 = arith.constant 0 : index
    %c0_6 = arith.constant 0 : index
    %c0_7 = arith.constant 0 : index
    %3 = vector.load %arg0[%c0_5, %c0_6, %c0_7] : memref<2x10x128xf32, #tpu.memory_space<vmem>>, vector<1x10x128xf32>
    %4 = vector.shape_cast %3 : vector<1x10x128xf32> to vector<10x128xf32>
    %cst = arith.constant dense<0.000000e+00> : vector<10x16xf32>
    %5 = tpu.matmul %4, %0, %cst {dimension_numbers = #tpu.dot_dimension_numbers<[1], [0], [0], [1], [0, 0, 1, 1], [], []>} : vector<10x128xf32>, vector<128x16xf32>, vector<10x16xf32> -> vector<10x16xf32>
    %6 = vector.broadcast %1 : vector<1x16xf32> to vector<10x16xf32>
    %7 = arith.addf %5, %6 : vector<10x16xf32>
    %cst_8 = arith.constant 0.000000e+00 : f32
    %8 = vector.broadcast %cst_8 : f32 to vector<10x16xf32>
    %9 = arith.maximumf %7, %8 : vector<10x16xf32>
    %10 = vector.extract_strided_slice %9 {offsets = [0, 0], sizes = [1, 16], strides = [1, 1]} : vector<10x16xf32> to vector<1x16xf32>
    %11 = vector.extract_strided_slice %9 {offsets = [1, 0], sizes = [1, 16], strides = [1, 1]} : vector<10x16xf32> to vector<1x16xf32>
    %12 = arith.maximumf %10, %11 : vector<1x16xf32>
    %13 = vector.extract_strided_slice %9 {offsets = [2, 0], sizes = [1, 16], strides = [1, 1]} : vector<10x16xf32> to vector<1x16xf32>
    %14 = vector.extract_strided_slice %9 {offsets = [3, 0], sizes = [1, 16], strides = [1, 1]} : vector<10x16xf32> to vector<1x16xf32>
    %15 = arith.maximumf %13, %14 : vector<1x16xf32>
    %16 = vector.extract_strided_slice %9 {offsets = [4, 0], sizes = [1, 16], strides = [1, 1]} : vector<10x16xf32> to vector<1x16xf32>
    %17 = vector.extract_strided_slice %9 {offsets = [5, 0], sizes = [1, 16], strides = [1, 1]} : vector<10x16xf32> to vector<1x16xf32>
    %18 = arith.maximumf %16, %17 : vector<1x16xf32>
    %19 = vector.extract_strided_slice %9 {offsets = [6, 0], sizes = [1, 16], strides = [1, 1]} : vector<10x16xf32> to vector<1x16xf32>
    %20 = vector.extract_strided_slice %9 {offsets = [7, 0], sizes = [1, 16], strides = [1, 1]} : vector<10x16xf32> to vector<1x16xf32>
    %21 = arith.maximumf %19, %20 : vector<1x16xf32>
    %22 = vector.extract_strided_slice %9 {offsets = [8, 0], sizes = [1, 16], strides = [1, 1]} : vector<10x16xf32> to vector<1x16xf32>
    %23 = vector.extract_strided_slice %9 {offsets = [9, 0], sizes = [1, 16], strides = [1, 1]} : vector<10x16xf32> to vector<1x16xf32>
    %24 = arith.maximumf %22, %23 : vector<1x16xf32>
    %c0_9 = arith.constant 0 : index
    %c0_10 = arith.constant 0 : index
    %c0_11 = arith.constant 0 : index
    %25 = vector.load %arg3[%c0_9, %c0_10, %c0_11] : memref<5x16x32xf32, #tpu.memory_space<vmem>>, vector<1x16x32xf32>
    %26 = vector.shape_cast %25 : vector<1x16x32xf32> to vector<16x32xf32>
    %cst_12 = arith.constant dense<0.000000e+00> : vector<1x32xf32>
    %27 = tpu.matmul %12, %26, %cst_12 {dimension_numbers = #tpu.dot_dimension_numbers<[1], [0], [0], [1], [0, 0, 1, 1], [], []>} : vector<1x16xf32>, vector<16x32xf32>, vector<1x32xf32> -> vector<1x32xf32>
    %28 = arith.addf %2, %27 : vector<1x32xf32>
    %c1 = arith.constant 1 : index
    %c0_13 = arith.constant 0 : index
    %c0_14 = arith.constant 0 : index
    %29 = vector.load %arg3[%c1, %c0_13, %c0_14] : memref<5x16x32xf32, #tpu.memory_space<vmem>>, vector<1x16x32xf32>
    %30 = vector.shape_cast %29 : vector<1x16x32xf32> to vector<16x32xf32>
    %cst_15 = arith.constant dense<0.000000e+00> : vector<1x32xf32>
    %31 = tpu.matmul %15, %30, %cst_15 {dimension_numbers = #tpu.dot_dimension_numbers<[1], [0], [0], [1], [0, 0, 1, 1], [], []>} : vector<1x16xf32>, vector<16x32xf32>, vector<1x32xf32> -> vector<1x32xf32>
    %32 = arith.addf %28, %31 : vector<1x32xf32>
    %c2 = arith.constant 2 : index
    %c0_16 = arith.constant 0 : index
    %c0_17 = arith.constant 0 : index
    %33 = vector.load %arg3[%c2, %c0_16, %c0_17] : memref<5x16x32xf32, #tpu.memory_space<vmem>>, vector<1x16x32xf32>
    %34 = vector.shape_cast %33 : vector<1x16x32xf32> to vector<16x32xf32>
    %cst_18 = arith.constant dense<0.000000e+00> : vector<1x32xf32>
    %35 = tpu.matmul %18, %34, %cst_18 {dimension_numbers = #tpu.dot_dimension_numbers<[1], [0], [0], [1], [0, 0, 1, 1], [], []>} : vector<1x16xf32>, vector<16x32xf32>, vector<1x32xf32> -> vector<1x32xf32>
    %36 = arith.addf %32, %35 : vector<1x32xf32>
    %c3 = arith.constant 3 : index
    %c0_19 = arith.constant 0 : index
    %c0_20 = arith.constant 0 : index
    %37 = vector.load %arg3[%c3, %c0_19, %c0_20] : memref<5x16x32xf32, #tpu.memory_space<vmem>>, vector<1x16x32xf32>
    %38 = vector.shape_cast %37 : vector<1x16x32xf32> to vector<16x32xf32>
    %cst_21 = arith.constant dense<0.000000e+00> : vector<1x32xf32>
    %39 = tpu.matmul %21, %38, %cst_21 {dimension_numbers = #tpu.dot_dimension_numbers<[1], [0], [0], [1], [0, 0, 1, 1], [], []>} : vector<1x16xf32>, vector<16x32xf32>, vector<1x32xf32> -> vector<1x32xf32>
    %40 = arith.addf %36, %39 : vector<1x32xf32>
    %c4 = arith.constant 4 : index
    %c0_22 = arith.constant 0 : index
    %c0_23 = arith.constant 0 : index
    %41 = vector.load %arg3[%c4, %c0_22, %c0_23] : memref<5x16x32xf32, #tpu.memory_space<vmem>>, vector<1x16x32xf32>
    %42 = vector.shape_cast %41 : vector<1x16x32xf32> to vector<16x32xf32>
    %cst_24 = arith.constant dense<0.000000e+00> : vector<1x32xf32>
    %43 = tpu.matmul %24, %42, %cst_24 {dimension_numbers = #tpu.dot_dimension_numbers<[1], [0], [0], [1], [0, 0, 1, 1], [], []>} : vector<1x16xf32>, vector<16x32xf32>, vector<1x32xf32> -> vector<1x32xf32>
    %44 = arith.addf %40, %43 : vector<1x32xf32>
    %cst_25 = arith.constant 0.000000e+00 : f32
    %45 = vector.broadcast %cst_25 : f32 to vector<1x32xf32>
    %46 = arith.maximumf %44, %45 : vector<1x32xf32>
    %c1_26 = arith.constant 1 : index
    %c0_27 = arith.constant 0 : index
    %c0_28 = arith.constant 0 : index
    %47 = vector.load %arg0[%c1_26, %c0_27, %c0_28] : memref<2x10x128xf32, #tpu.memory_space<vmem>>, vector<1x10x128xf32>
    %48 = vector.shape_cast %47 : vector<1x10x128xf32> to vector<10x128xf32>
    %cst_29 = arith.constant dense<0.000000e+00> : vector<10x16xf32>
    %49 = tpu.matmul %48, %0, %cst_29 {dimension_numbers = #tpu.dot_dimension_numbers<[1], [0], [0], [1], [0, 0, 1, 1], [], []>} : vector<10x128xf32>, vector<128x16xf32>, vector<10x16xf32> -> vector<10x16xf32>
    %50 = vector.broadcast %1 : vector<1x16xf32> to vector<10x16xf32>
    %51 = arith.addf %49, %50 : vector<10x16xf32>
    %cst_30 = arith.constant 0.000000e+00 : f32
    %52 = vector.broadcast %cst_30 : f32 to vector<10x16xf32>
    %53 = arith.maximumf %51, %52 : vector<10x16xf32>
    %54 = vector.extract_strided_slice %53 {offsets = [0, 0], sizes = [1, 16], strides = [1, 1]} : vector<10x16xf32> to vector<1x16xf32>
    %55 = vector.extract_strided_slice %53 {offsets = [1, 0], sizes = [1, 16], strides = [1, 1]} : vector<10x16xf32> to vector<1x16xf32>
    %56 = arith.maximumf %54, %55 : vector<1x16xf32>
    %57 = vector.extract_strided_slice %53 {offsets = [2, 0], sizes = [1, 16], strides = [1, 1]} : vector<10x16xf32> to vector<1x16xf32>
    %58 = vector.extract_strided_slice %53 {offsets = [3, 0], sizes = [1, 16], strides = [1, 1]} : vector<10x16xf32> to vector<1x16xf32>
    %59 = arith.maximumf %57, %58 : vector<1x16xf32>
    %60 = vector.extract_strided_slice %53 {offsets = [4, 0], sizes = [1, 16], strides = [1, 1]} : vector<10x16xf32> to vector<1x16xf32>
    %61 = vector.extract_strided_slice %53 {offsets = [5, 0], sizes = [1, 16], strides = [1, 1]} : vector<10x16xf32> to vector<1x16xf32>
    %62 = arith.maximumf %60, %61 : vector<1x16xf32>
    %63 = vector.extract_strided_slice %53 {offsets = [6, 0], sizes = [1, 16], strides = [1, 1]} : vector<10x16xf32> to vector<1x16xf32>
    %64 = vector.extract_strided_slice %53 {offsets = [7, 0], sizes = [1, 16], strides = [1, 1]} : vector<10x16xf32> to vector<1x16xf32>
    %65 = arith.maximumf %63, %64 : vector<1x16xf32>
    %66 = vector.extract_strided_slice %53 {offsets = [8, 0], sizes = [1, 16], strides = [1, 1]} : vector<10x16xf32> to vector<1x16xf32>
    %67 = vector.extract_strided_slice %53 {offsets = [9, 0], sizes = [1, 16], strides = [1, 1]} : vector<10x16xf32> to vector<1x16xf32>
    %68 = arith.maximumf %66, %67 : vector<1x16xf32>
    %c0_31 = arith.constant 0 : index
    %c0_32 = arith.constant 0 : index
    %c0_33 = arith.constant 0 : index
    %69 = vector.load %arg3[%c0_31, %c0_32, %c0_33] : memref<5x16x32xf32, #tpu.memory_space<vmem>>, vector<1x16x32xf32>
    %70 = vector.shape_cast %69 : vector<1x16x32xf32> to vector<16x32xf32>
    %cst_34 = arith.constant dense<0.000000e+00> : vector<1x32xf32>
    %71 = tpu.matmul %56, %70, %cst_34 {dimension_numbers = #tpu.dot_dimension_numbers<[1], [0], [0], [1], [0, 0, 1, 1], [], []>} : vector<1x16xf32>, vector<16x32xf32>, vector<1x32xf32> -> vector<1x32xf32>
    %72 = arith.addf %2, %71 : vector<1x32xf32>
    %c1_35 = arith.constant 1 : index
    %c0_36 = arith.constant 0 : index
    %c0_37 = arith.constant 0 : index
    %73 = vector.load %arg3[%c1_35, %c0_36, %c0_37] : memref<5x16x32xf32, #tpu.memory_space<vmem>>, vector<1x16x32xf32>
    %74 = vector.shape_cast %73 : vector<1x16x32xf32> to vector<16x32xf32>
    %cst_38 = arith.constant dense<0.000000e+00> : vector<1x32xf32>
    %75 = tpu.matmul %59, %74, %cst_38 {dimension_numbers = #tpu.dot_dimension_numbers<[1], [0], [0], [1], [0, 0, 1, 1], [], []>} : vector<1x16xf32>, vector<16x32xf32>, vector<1x32xf32> -> vector<1x32xf32>
    %76 = arith.addf %72, %75 : vector<1x32xf32>
    %c2_39 = arith.constant 2 : index
    %c0_40 = arith.constant 0 : index
    %c0_41 = arith.constant 0 : index
    %77 = vector.load %arg3[%c2_39, %c0_40, %c0_41] : memref<5x16x32xf32, #tpu.memory_space<vmem>>, vector<1x16x32xf32>
    %78 = vector.shape_cast %77 : vector<1x16x32xf32> to vector<16x32xf32>
    %cst_42 = arith.constant dense<0.000000e+00> : vector<1x32xf32>
    %79 = tpu.matmul %62, %78, %cst_42 {dimension_numbers = #tpu.dot_dimension_numbers<[1], [0], [0], [1], [0, 0, 1, 1], [], []>} : vector<1x16xf32>, vector<16x32xf32>, vector<1x32xf32> -> vector<1x32xf32>
    %80 = arith.addf %76, %79 : vector<1x32xf32>
    %c3_43 = arith.constant 3 : index
    %c0_44 = arith.constant 0 : index
    %c0_45 = arith.constant 0 : index
    %81 = vector.load %arg3[%c3_43, %c0_44, %c0_45] : memref<5x16x32xf32, #tpu.memory_space<vmem>>, vector<1x16x32xf32>
    %82 = vector.shape_cast %81 : vector<1x16x32xf32> to vector<16x32xf32>
    %cst_46 = arith.constant dense<0.000000e+00> : vector<1x32xf32>
    %83 = tpu.matmul %65, %82, %cst_46 {dimension_numbers = #tpu.dot_dimension_numbers<[1], [0], [0], [1], [0, 0, 1, 1], [], []>} : vector<1x16xf32>, vector<16x32xf32>, vector<1x32xf32> -> vector<1x32xf32>
    %84 = arith.addf %80, %83 : vector<1x32xf32>
    %c4_47 = arith.constant 4 : index
    %c0_48 = arith.constant 0 : index
    %c0_49 = arith.constant 0 : index
    %85 = vector.load %arg3[%c4_47, %c0_48, %c0_49] : memref<5x16x32xf32, #tpu.memory_space<vmem>>, vector<1x16x32xf32>
    %86 = vector.shape_cast %85 : vector<1x16x32xf32> to vector<16x32xf32>
    %cst_50 = arith.constant dense<0.000000e+00> : vector<1x32xf32>
    %87 = tpu.matmul %68, %86, %cst_50 {dimension_numbers = #tpu.dot_dimension_numbers<[1], [0], [0], [1], [0, 0, 1, 1], [], []>} : vector<1x16xf32>, vector<16x32xf32>, vector<1x32xf32> -> vector<1x32xf32>
    %88 = arith.addf %84, %87 : vector<1x32xf32>
    %cst_51 = arith.constant 0.000000e+00 : f32
    %89 = vector.broadcast %cst_51 : f32 to vector<1x32xf32>
    %90 = arith.maximumf %88, %89 : vector<1x32xf32>
    %91 = tpu.concatenate %46, %90 in 0 : vector<1x32xf32>, vector<1x32xf32> -> vector<2x32xf32>
    %cst_52 = arith.constant 0.000000e+00 : f32
    %92 = vector.broadcast %cst_52 : f32 to vector<2x32xf32>
    %93 = arith.maximumf %91, %92 : vector<2x32xf32>
    %c0_53 = arith.constant 0 : index
    %c0_54 = arith.constant 0 : index
    %94 = vector.load %arg5[%c0_53, %c0_54] : memref<32x32xf32, #tpu.memory_space<vmem>>, vector<32x32xf32>
    %cst_55 = arith.constant dense<0.000000e+00> : vector<2x32xf32>
    %95 = tpu.matmul %93, %94, %cst_55 {dimension_numbers = #tpu.dot_dimension_numbers<[1], [0], [0], [1], [0, 0, 1, 1], [], []>} : vector<2x32xf32>, vector<32x32xf32>, vector<2x32xf32> -> vector<2x32xf32>
    %c0_56 = arith.constant 0 : index
    %c0_57 = arith.constant 0 : index
    %96 = vector.load %arg6[%c0_56, %c0_57] : memref<1x32xf32, #tpu.memory_space<vmem>>, vector<1x32xf32>
    %97 = vector.broadcast %96 : vector<1x32xf32> to vector<2x32xf32>
    %98 = arith.addf %95, %97 : vector<2x32xf32>
    %cst_58 = arith.constant 0.000000e+00 : f32
    %99 = vector.broadcast %cst_58 : f32 to vector<2x32xf32>
    %100 = arith.maximumf %98, %99 : vector<2x32xf32>
    %c0_59 = arith.constant 0 : index
    %c0_60 = arith.constant 0 : index
    %101 = vector.load %arg7[%c0_59, %c0_60] : memref<32x2xf32, #tpu.memory_space<vmem>>, vector<32x2xf32>
    %cst_61 = arith.constant dense<0.000000e+00> : vector<2x2xf32>
    %102 = tpu.matmul %100, %101, %cst_61 {dimension_numbers = #tpu.dot_dimension_numbers<[1], [0], [0], [1], [0, 0, 1, 1], [], []>} : vector<2x32xf32>, vector<32x2xf32>, vector<2x2xf32> -> vector<2x2xf32>
    %c0_62 = arith.constant 0 : index
    %c0_63 = arith.constant 0 : index
    %103 = vector.load %arg8[%c0_62, %c0_63] : memref<1x2xf32, #tpu.memory_space<vmem>>, vector<1x2xf32>
    %104 = vector.broadcast %103 : vector<1x2xf32> to vector<2x2xf32>
    %105 = arith.addf %102, %104 : vector<2x2xf32>
    %cst_64 = arith.constant dense<0xFF800000> : vector<2xf32>
    %106 = vector.multi_reduction <maximumf>, %105, %cst_64 [1] : vector<2x2xf32> to vector<2xf32>
    %107 = vector.shape_cast %106 : vector<2xf32> to vector<2x1xf32>
    %108 = vector.broadcast %107 : vector<2x1xf32> to vector<2x2xf32>
    %109 = arith.subf %105, %108 : vector<2x2xf32>
    %110 = math.exp %109 : vector<2x2xf32>
    %cst_65 = arith.constant dense<0.000000e+00> : vector<2xf32>
    %111 = vector.multi_reduction <add>, %110, %cst_65 [1] : vector<2x2xf32> to vector<2xf32>
    %112 = vector.shape_cast %111 : vector<2xf32> to vector<2x1xf32>
    %113 = math.log %112 : vector<2x1xf32>
    %114 = arith.addf %113, %107 : vector<2x1xf32>
    %115 = vector.broadcast %114 : vector<2x1xf32> to vector<2x2xf32>
    %116 = arith.subf %105, %115 : vector<2x2xf32>
    %c0_66 = arith.constant 0 : index
    %c0_67 = arith.constant 0 : index
    %117 = vector.load %arg10[%c0_66, %c0_67] : memref<2x2xf32, #tpu.memory_space<vmem>>, vector<2x2xf32>
    tpu.vector_store %arg10[%c0_66, %c0_67], %116 {strides = array<i32>} : memref<2x2xf32, #tpu.memory_space<vmem>>, vector<2x2xf32>,
    %118 = tpu.iota {dimensions = array<i32: 1>} : vector<2x2xi32>
    %c0_68 = arith.constant 0 : index
    %c0_69 = arith.constant 0 : index
    %119 = vector.load %arg9[%c0_68, %c0_69] : memref<2x1xi32, #tpu.memory_space<vmem>>, vector<2x1xi32>
    %120 = vector.broadcast %119 : vector<2x1xi32> to vector<2x2xi32>
    %121 = arith.cmpi eq, %118, %120 : vector<2x2xi32>
    %cst_70 = arith.constant 0.000000e+00 : f32
    %122 = vector.broadcast %cst_70 : f32 to vector<2x2xf32>
    %123 = arith.select %121, %116, %122 : vector<2x2xi1>, vector<2x2xf32>
    %cst_71 = arith.constant dense<0.000000e+00> : vector<2xf32>
    %124 = vector.multi_reduction <add>, %123, %cst_71 [1] : vector<2x2xf32> to vector<2xf32>
    %125 = vector.shape_cast %124 : vector<2xf32> to vector<2x1xf32>
    %cst_72 = arith.constant 0.000000e+00 : f32
    %126 = vector.broadcast %cst_72 : f32 to vector<2x1xf32>
    %127 = arith.subf %126, %125 : vector<2x1xf32>
    %cst_73 = arith.constant dense<0.000000e+00> : vector<1xf32>
    %128 = vector.multi_reduction <add>, %127, %cst_73 [0] : vector<2x1xf32> to vector<1xf32>
    %129 = vector.shape_cast %128 : vector<1xf32> to vector<1x1xf32>
    %cst_74 = arith.constant 2.000000e+00 : f32
    %130 = vector.broadcast %cst_74 : f32 to vector<1x1xf32>
    %131 = arith.divf %129, %130 : vector<1x1xf32>
    %c0_75 = arith.constant 0 : index
    %c0_76 = arith.constant 0 : index
    %132 = vector.load %arg11[%c0_75, %c0_76] : memref<1x1xf32, #tpu.memory_space<vmem>>, vector<1x1xf32>
    tpu.vector_store %arg11[%c0_75, %c0_76], %131 {strides = array<i32>} : memref<1x1xf32, #tpu.memory_space<vmem>>, vector<1x1xf32>,
    return
  }
}

</mosaic_0001>

<llo_original>
// kernel: classifier_forward.2
$region0: #{classifier_forward.2}
  #allocation0 [shape = 'u32[]', space=smem, size = 0x4, offset = 0x4, fixed_abs, tag = 'smem constant byte address 0x4 - core index']
  #allocation1 [shape = 'u32[144,128]{1,0:T(1,128)}', space=vmem, size = 0x12000, scoped, tag = 'internal scratch']
  #allocation2 [shape = 'f32[1,1]{1,0:T(1,128)S(1)}', space=vmem, size = 0x200, scoped, tag = 'scoped memory for classifier_forward.2']
  %s0 = inlined_call_operand.vmem [shape: f32[32,32], index: 0, kind: input, shape index: {}]
  %s1 = inlined_call_operand.vmem [shape: f32[32,4], index: 1, kind: input, shape index: {}]
  %s2 = inlined_call_operand.vmem [shape: f32[32,1], index: 2, kind: input, shape index: {}]
  %s3 = inlined_call_operand.vmem [shape: f32[4,32], index: 3, kind: input, shape index: {}]
  %s4 = inlined_call_operand.vmem [shape: f32[1,32], index: 4, kind: input, shape index: {}]
  %s5 = inlined_call_operand.vmem [shape: f32[32,32], index: 5, kind: input, shape index: {}]
  %s6 = inlined_call_operand.vmem [shape: f32[1,32], index: 6, kind: input, shape index: {}]
  %s7 = inlined_call_operand.vmem [shape: f32[32,32], index: 7, kind: input, shape index: {}]
  %s8 = inlined_call_operand.vmem [shape: f32[1,32], index: 8, kind: input, shape index: {}]
  %s9 = inlined_call_operand.vmem [shape: f32[1,32], index: 9, kind: input, shape index: {}]
  %s10 = inlined_call_operand.<no memory space> [shape: f32[1,1], index: 10, kind: input, shape index: {}]
  %s11 = inlined_call_operand.vmem [shape: f32[32,128], index: 11, kind: output, shape index: {}]
  %s12 = sld [smem:[#allocation0]]
  $region54: #{classifier_forward.2} parent=0
    _
  %s14 = ssub.s32 1, %s12
  %s15 = scalar_select 0, %s14, %s12
  %v16 = vstv %s10
  %17 = vst [vmem:[#allocation2] sm:$0x1] %v16
  // Predicated region
  $region2: #{classifier_forward.2} parent=0 // pred_check
    _
  $region3: #{classifier_forward.2} parent=0 // pred_check_branch
    %19 = sbr.rel (0) target = $region5
  $region4: #{classifier_forward.2} parent=0 // pred_region
    _
  $region5: #{classifier_forward.2} parent=0 // pred_fallthru
    _
  // Predicated region
  $region6: #{classifier_forward.2} parent=0 // pred_check
    _
  $region7: #{classifier_forward.2} parent=0 // pred_check_branch
    %21 = sbr.rel (0) target = $region9
  $region8: #{classifier_forward.2} parent=0 // pred_region
    _
  $region9: #{classifier_forward.2} parent=0 // pred_fallthru
    _
  // Predicated region
  $region10: #{classifier_forward.2} parent=0 // pred_check
    _
  $region11: #{classifier_forward.2} parent=0 // pred_check_branch
    %23 = sbr.rel (0) target = $region13
  $region12: #{classifier_forward.2} parent=0 // pred_region
    _
  $region13: #{classifier_forward.2} parent=0 // pred_fallthru
    _
  // Predicated region
  $region14: #{classifier_forward.2} parent=0 // pred_check
    _
  $region15: #{classifier_forward.2} parent=0 // pred_check_branch
    %25 = sbr.rel (0) target = $region17
  $region16: #{classifier_forward.2} parent=0 // pred_region
    _
  $region17: #{classifier_forward.2} parent=0 // pred_fallthru
    _
  // Predicated region
  $region18: #{classifier_forward.2} parent=0 // pred_check
    _
  $region19: #{classifier_forward.2} parent=0 // pred_check_branch
    %27 = sbr.rel (0) target = $region21
  $region20: #{classifier_forward.2} parent=0 // pred_region
    _
  $region21: #{classifier_forward.2} parent=0 // pred_fallthru
    _
  // Predicated region
  $region22: #{classifier_forward.2} parent=0 // pred_check
    _
  $region23: #{classifier_forward.2} parent=0 // pred_check_branch
    %29 = sbr.rel (0) target = $region25
  $region24: #{classifier_forward.2} parent=0 // pred_region
    _
  $region25: #{classifier_forward.2} parent=0 // pred_fallthru
    _
  // Predicated region
  $region26: #{classifier_forward.2} parent=0 // pred_check
    _
  $region27: #{classifier_forward.2} parent=0 // pred_check_branch
    %31 = sbr.rel (0) target = $region29
  $region28: #{classifier_forward.2} parent=0 // pred_region
    _
  $region29: #{classifier_forward.2} parent=0 // pred_fallthru
    _
  // Predicated region
  $region30: #{classifier_forward.2} parent=0 // pred_check
    _
  $region31: #{classifier_forward.2} parent=0 // pred_check_branch
    %33 = sbr.rel (0) target = $region33
  $region32: #{classifier_forward.2} parent=0 // pred_region
    _
  $region33: #{classifier_forward.2} parent=0 // pred_fallthru
    _
  // Predicated region
  $region34: #{classifier_forward.2} parent=0 // pred_check
    _
  $region35: #{classifier_forward.2} parent=0 // pred_check_branch
    %35 = sbr.rel (0) target = $region37
  $region36: #{classifier_forward.2} parent=0 // pred_region
    _
  $region37: #{classifier_forward.2} parent=0 // pred_fallthru
    _
  // Predicated region
  $region38: #{classifier_forward.2} parent=0 // pred_check
    _
  $region39: #{classifier_forward.2} parent=0 // pred_check_branch
    %37 = sbr.rel (0) target = $region41
  $region40: #{classifier_forward.2} parent=0 // pred_region
    _
  $region41: #{classifier_forward.2} parent=0 // pred_fallthru
    _
  // Predicated region
  $region42: #{classifier_forward.2} parent=0 // pred_check
    _
  $region43: #{classifier_forward.2} parent=0 // pred_check_branch
    %39 = sbr.rel (0) target = $region45
  $region44: #{classifier_forward.2} parent=0 // pred_region
    _
  $region45: #{classifier_forward.2} parent=0 // pred_fallthru
    _
  %v40 = vld [vmem:[%s0] sm:$0xff]
  %v41 = vld [vmem:[%s0 + $0x8] sm:$0xff]
  %v42 = vld [vmem:[%s0 + $0x10] sm:$0xff]
  %v43 = vld [vmem:[%s0 + $0x18] sm:$0xff]
  %v44 = vld [vmem:[%s2] sm:$0xff]
  %v45 = vld [vmem:[%s2 + $0x8] sm:$0xff]
  %v46 = vld [vmem:[%s2 + $0x10] sm:$0xff]
  %v47 = vld [vmem:[%s2 + $0x18] sm:$0xff]
  %v48 = vld [vmem:[%s1] sm:$0xff]
  %v49 = vld [vmem:[%s1 + $0x8] sm:$0xff]
  %v50 = vld [vmem:[%s1 + $0x10] sm:$0xff]
  %v51 = vld [vmem:[%s1 + $0x18] sm:$0xff]
  %v52 = vld [vmem:[%s3] sm:$0xf]
  %v53 = vld [vmem:[%s4] sm:$0x1]
  %vm54 = vcmask 261120
  %v56 = vsel %vm54, %v40, 0
  %v59 = vsel %vm54, %v41, 0
  %v62 = vsel %vm54, %v42, 0
  %v65 = vsel %vm54, %v43, 0
  %67 = vmatprep.subr.mxu0 0.0
  %68 = vmatpush1.msra.mxu0 %v48
  %69 = vmatprep.subr.mxu0 0.0
  %70 = vmatpush1.msra.mxu0 %v49
  %71 = vmatprep.subr.mxu0 0.0
  %72 = vmatpush1.msra.mxu0 %v50
  %73 = vmatprep.subr.mxu0 0.0
  %74 = vmatpush1.msra.mxu0 %v51
  %75 = vmatprep.subr.mxu0 0.0
  %76 = vmatpush1.msra.mxu0 0.0
  %77 = vmatprep.subr.mxu0 0.0
  %78 = vmatpush1.msra.mxu0 0.0
  %79 = vmatprep.subr.mxu0 0.0
  %80 = vmatpush1.msra.mxu0 0.0
  %81 = vmatprep.subr.mxu0 0.0
  %82 = vmatpush1.msra.mxu0 0.0
  %83 = vmatprep.subr.mxu0 0.0
  %84 = vmatpush1.msra.mxu0 0.0
  %85 = vmatprep.subr.mxu0 0.0
  %86 = vmatpush1.msra.mxu0 0.0
  %87 = vmatprep.subr.mxu0 0.0
  %88 = vmatpush1.msra.mxu0 0.0
  %89 = vmatprep.subr.mxu0 0.0
  %90 = vmatpush1.msra.mxu0 0.0
  %91 = vmatprep.subr.mxu0 0.0
  %92 = vmatpush1.msra.mxu0 0.0
  %93 = vmatprep.subr.mxu0 0.0
  %94 = vmatpush1.msra.mxu0 0.0
  %95 = vmatprep.subr.mxu0 0.0
  %96 = vmatpush1.msra.mxu0 0.0
  %97 = vmatprep.subr.mxu0 0.0
  %98 = vmatpush1.msra.mxu0 0.0
  %99 = vmatprep.subr.mxu0 0.0
  %100 = vmatpush1.msra.mxu0 0.0
  %101 = vmatprep.subr.mxu0 0.0
  %102 = vmatpush1.msra.mxu0 0.0
  %103 = vmatprep.subr.mxu0 0.0
  %104 = vmatpush1.msra.mxu0 0.0
  %105 = vmatprep.subr.mxu0 0.0
  %106 = vmatpush1.msra.mxu0 0.0
  %107 = vmatprep.subr.mxu0 0.0
  %108 = vmatpush1.msra.mxu0 0.0
  %109 = vmatprep.subr.mxu0 0.0
  %110 = vmatpush1.msra.mxu0 0.0
  %111 = vmatprep.subr.mxu0 0.0
  %112 = vmatpush1.msra.mxu0 0.0
  %113 = vmatprep.subr.mxu0 0.0
  %114 = vmatpush1.msra.mxu0 0.0
  %115 = vmatprep.subr.mxu0 0.0
  %116 = vmatpush1.msra.mxu0 0.0
  %117 = vmatprep.subr.mxu0 0.0
  %118 = vmatpush1.msra.mxu0 0.0
  %119 = vmatprep.subr.mxu0 0.0
  %120 = vmatpush1.msra.mxu0 0.0
  %121 = vmatprep.subr.mxu0 0.0
  %122 = vmatpush1.msra.mxu0 0.0
  %123 = vmatprep.subr.mxu0 0.0
  %124 = vmatpush1.msra.mxu0 0.0
  %125 = vmatprep.subr.mxu0 0.0
  %126 = vmatpush1.msra.mxu0 0.0
  %127 = vmatprep.subr.mxu0 0.0
  %128 = vmatpush1.msra.mxu0 0.0
  %129 = vmatprep.subr.mxu0 0.0
  %130 = vmatpush1.msra.mxu0 0.0
  %131 = vmatprep.mubr.f32.mxu0 0.0
  %132 = vmatmul.mubr.f32.gmra.mrb[0].mxu0 %v56
  %v133 = vpop.f32.mrb[0].mxu0
  %v134 = vadd.f32 0.0, %v133
  %v135 = vpop.f32.mrb[0].mxu0
  %136 = vmatprep.mubr.f32.mxu0 0.0
  %137 = vmatmul.mubr.f32.gmra.mrb[0].mxu0 %v59
  %v138 = vpop.f32.mrb[0].mxu0
  %v139 = vadd.f32 0.0, %v138
  %v140 = vpop.f32.mrb[0].mxu0
  %141 = vmatprep.mubr.f32.mxu0 0.0
  %142 = vmatmul.mubr.f32.gmra.mrb[0].mxu0 %v62
  %v143 = vpop.f32.mrb[0].mxu0
  %v144 = vadd.f32 0.0, %v143
  %v145 = vpop.f32.mrb[0].mxu0
  %146 = vmatprep.mubr.f32.mxu0 0.0
  %147 = vmatmul.mubr.f32.gmra.mrb[0].mxu0 %v65
  %v148 = vpop.f32.mrb[0].mxu0
  %v149 = vadd.f32 0.0, %v148
  %v150 = vpop.f32.mrb[0].mxu0
  %151 = vdwg.mxu0
  %v153 = vlaneseq
  %v154 = vshrl.u32 %v153, 7
  %v155 = vsub.s32 0, %v154
  %v156 = vrot.slane %v53, %v155
  %vm158 = vcmask 31744
  %v160 = vsel %vm158, %v134, 0
  %v163 = vsel %vm158, %v139, 0
  %v166 = vsel %vm158, %v144, 0
  %v169 = vsel %vm158, %v149, 0
  %vm171 = vcmask 1043456
  %v173 = vsel %vm171, %v52, 0
  %175 = vmatprep.subr.mxu0 0.0
  %176 = vmatpush1.msra.mxu0 %v173
  %177 = vmatprep.subr.mxu0 0.0
  %178 = vmatpush1.msra.mxu0 0.0
  %179 = vmatprep.subr.mxu0 0.0
  %180 = vmatpush1.msra.mxu0 0.0
  %181 = vmatprep.subr.mxu0 0.0
  %182 = vmatpush1.msra.mxu0 0.0
  %183 = vmatprep.subr.mxu0 0.0
  %184 = vmatpush1.msra.mxu0 0.0
  %185 = vmatprep.subr.mxu0 0.0
  %186 = vmatpush1.msra.mxu0 0.0
  %187 = vmatprep.subr.mxu0 0.0
  %188 = vmatpush1.msra.mxu0 0.0
  %189 = vmatprep.subr.mxu0 0.0
  %190 = vmatpush1.msra.mxu0 0.0
  %191 = vmatprep.subr.mxu0 0.0
  %192 = vmatpush1.msra.mxu0 0.0
  %193 = vmatprep.subr.mxu0 0.0
  %194 = vmatpush1.msra.mxu0 0.0
  %195 = vmatprep.subr.mxu0 0.0
  %196 = vmatpush1.msra.mxu0 0.0
  %197 = vmatprep.subr.mxu0 0.0
  %198 = vmatpush1.msra.mxu0 0.0
  %199 = vmatprep.subr.mxu0 0.0
  %200 = vmatpush1.msra.mxu0 0.0
  %201 = vmatprep.subr.mxu0 0.0
  %202 = vmatpush1.msra.mxu0 0.0
  %203 = vmatprep.subr.mxu0 0.0
  %204 = vmatpush1.msra.mxu0 0.0
  %205 = vmatprep.subr.mxu0 0.0
  %206 = vmatpush1.msra.mxu0 0.0
  %207 = vmatprep.subr.mxu0 0.0
  %208 = vmatpush1.msra.mxu0 0.0
  %209 = vmatprep.subr.mxu0 0.0
  %210 = vmatpush1.msra.mxu0 0.0
  %211 = vmatprep.subr.mxu0 0.0
  %212 = vmatpush1.msra.mxu0 0.0
  %213 = vmatprep.subr.mxu0 0.0
  %214 = vmatpush1.msra.mxu0 0.0
  %215 = vmatprep.subr.mxu0 0.0
  %216 = vmatpush1.msra.mxu0 0.0
  %217 = vmatprep.subr.mxu0 0.0
  %218 = vmatpush1.msra.mxu0 0.0
  %219 = vmatprep.subr.mxu0 0.0
  %220 = vmatpush1.msra.mxu0 0.0
  %221 = vmatprep.subr.mxu0 0.0
  %222 = vmatpush1.msra.mxu0 0.0
  %223 = vmatprep.subr.mxu0 0.0
  %224 = vmatpush1.msra.mxu0 0.0
  %225 = vmatprep.subr.mxu0 0.0
  %226 = vmatpush1.msra.mxu0 0.0
  %227 = vmatprep.subr.mxu0 0.0
  %228 = vmatpush1.msra.mxu0 0.0
  %229 = vmatprep.subr.mxu0 0.0
  %230 = vmatpush1.msra.mxu0 0.0
  %231 = vmatprep.subr.mxu0 0.0
  %232 = vmatpush1.msra.mxu0 0.0
  %233 = vmatprep.subr.mxu0 0.0
  %234 = vmatpush1.msra.mxu0 0.0
  %235 = vmatprep.subr.mxu0 0.0
  %236 = vmatpush1.msra.mxu0 0.0
  %237 = vmatprep.subr.mxu0 0.0
  %238 = vmatpush1.msra.mxu0 0.0
  %239 = vmatprep.mubr.f32.mxu0 0.0
  %240 = vmatmul.mubr.f32.gmra.mrb[0].mxu0 %v160
  %v241 = vpop.f32.mrb[0].mxu0
  %v242 = vadd.f32 %v156, %v241
  %v243 = vpop.f32.mrb[0].mxu0
  %244 = vmatprep.mubr.f32.mxu0 0.0
  %245 = vmatmul.mubr.f32.gmra.mrb[0].mxu0 %v163
  %v246 = vpop.f32.mrb[0].mxu0
  %v247 = vadd.f32 %v156, %v246
  %v248 = vpop.f32.mrb[0].mxu0
  %249 = vmatprep.mubr.f32.mxu0 0.0
  %250 = vmatmul.mubr.f32.gmra.mrb[0].mxu0 %v166
  %v251 = vpop.f32.mrb[0].mxu0
  %v252 = vadd.f32 %v156, %v251
  %v253 = vpop.f32.mrb[0].mxu0
  %254 = vmatprep.mubr.f32.mxu0 0.0
  %255 = vmatmul.mubr.f32.gmra.mrb[0].mxu0 %v169
  %v256 = vpop.f32.mrb[0].mxu0
  %v257 = vadd.f32 %v156, %v256
  %v258 = vpop.f32.mrb[0].mxu0
  %259 = vdwg.mxu0
  %261 = vset.pattern.permute.xlu0 0
  %262 = vperm.xlu0 %261, %v44
  %v263 = vpop.permute.xlu0 %262
  %266 = vset.pattern.permute.xlu0 0
  %267 = vperm.xlu0 %266, %v45
  %v268 = vpop.permute.xlu0 %267
  %271 = vset.pattern.permute.xlu0 0
  %272 = vperm.xlu0 %271, %v46
  %v273 = vpop.permute.xlu0 %272
  %276 = vset.pattern.permute.xlu0 0
  %277 = vperm.xlu0 %276, %v47
  %v278 = vpop.permute.xlu0 %277
  %v280 = vmul.f32 %v242, %v263
  %v281 = vmul.f32 %v247, %v268
  %v282 = vmul.f32 %v252, %v273
  %v283 = vmul.f32 %v257, %v278
  %v284 = vtanh.pop %v280
  %v285 = vtanh.pop %v281
  %v286 = vtanh.pop %v282
  %v287 = vtanh.pop %v283
  %v288 = vld [vmem:[%s5] sm:$0xff]
  %v289 = vld [vmem:[%s5 + $0x8] sm:$0xff]
  %v290 = vld [vmem:[%s5 + $0x10] sm:$0xff]
  %v291 = vld [vmem:[%s5 + $0x18] sm:$0xff]
  %v292 = vld [vmem:[%s6] sm:$0x1]
  %293 = vmatprep.subr.mxu0 0.0
  %294 = vmatpush1.msra.mxu0 %v284
  %295 = vmatprep.subr.mxu0 0.0
  %296 = vmatpush1.msra.mxu0 %v285
  %297 = vmatprep.subr.mxu0 0.0
  %298 = vmatpush1.msra.mxu0 %v286
  %299 = vmatprep.subr.mxu0 0.0
  %300 = vmatpush1.msra.mxu0 %v287
  %301 = vmatprep.subr.mxu0 0.0
  %302 = vmatpush1.msra.mxu0 0.0
  %303 = vmatprep.subr.mxu0 0.0
  %304 = vmatpush1.msra.mxu0 0.0
  %305 = vmatprep.subr.mxu0 0.0
  %306 = vmatpush1.msra.mxu0 0.0
  %307 = vmatprep.subr.mxu0 0.0
  %308 = vmatpush1.msra.mxu0 0.0
  %309 = vmatprep.subr.mxu0 0.0
  %310 = vmatpush1.msra.mxu0 0.0
  %311 = vmatprep.subr.mxu0 0.0
  %312 = vmatpush1.msra.mxu0 0.0
  %313 = vmatprep.subr.mxu0 0.0
  %314 = vmatpush1.msra.mxu0 0.0
  %315 = vmatprep.subr.mxu0 0.0
  %316 = vmatpush1.msra.mxu0 0.0
  %317 = vmatprep.subr.mxu0 0.0
  %318 = vmatpush1.msra.mxu0 0.0
  %319 = vmatprep.subr.mxu0 0.0
  %320 = vmatpush1.msra.mxu0 0.0
  %321 = vmatprep.subr.mxu0 0.0
  %322 = vmatpush1.msra.mxu0 0.0
  %323 = vmatprep.subr.mxu0 0.0
  %324 = vmatpush1.msra.mxu0 0.0
  %325 = vmatprep.subr.mxu0 0.0
  %326 = vmatpush1.msra.mxu0 0.0
  %327 = vmatprep.subr.mxu0 0.0
  %328 = vmatpush1.msra.mxu0 0.0
  %329 = vmatprep.subr.mxu0 0.0
  %330 = vmatpush1.msra.mxu0 0.0
  %331 = vmatprep.subr.mxu0 0.0
  %332 = vmatpush1.msra.mxu0 0.0
  %333 = vmatprep.subr.mxu0 0.0
  %334 = vmatpush1.msra.mxu0 0.0
  %335 = vmatprep.subr.mxu0 0.0
  %336 = vmatpush1.msra.mxu0 0.0
  %337 = vmatprep.subr.mxu0 0.0
  %338 = vmatpush1.msra.mxu0 0.0
  %339 = vmatprep.subr.mxu0 0.0
  %340 = vmatpush1.msra.mxu0 0.0
  %341 = vmatprep.subr.mxu0 0.0
  %342 = vmatpush1.msra.mxu0 0.0
  %343 = vmatprep.subr.mxu0 0.0
  %344 = vmatpush1.msra.mxu0 0.0
  %345 = vmatprep.subr.mxu0 0.0
  %346 = vmatpush1.msra.mxu0 0.0
  %347 = vmatprep.subr.mxu0 0.0
  %348 = vmatpush1.msra.mxu0 0.0
  %349 = vmatprep.subr.mxu0 0.0
  %350 = vmatpush1.msra.mxu0 0.0
  %351 = vmatprep.subr.mxu0 0.0
  %352 = vmatpush1.msra.mxu0 0.0
  %353 = vmatprep.subr.mxu0 0.0
  %354 = vmatpush1.msra.mxu0 0.0
  %355 = vmatprep.subr.mxu0 0.0
  %356 = vmatpush1.msra.mxu0 0.0
  %357 = vmatprep.mubr.f32.mxu0 0.0
  %358 = vmatmul.mubr.f32.gmra.mrb[0].mxu0 %v56
  %v359 = vpop.f32.mrb[0].mxu0
  %v360 = vadd.f32 0.0, %v359
  %v361 = vpop.f32.mrb[0].mxu0
  %362 = vmatprep.mubr.f32.mxu0 0.0
  %363 = vmatmul.mubr.f32.gmra.mrb[0].mxu0 %v59
  %v364 = vpop.f32.mrb[0].mxu0
  %v365 = vadd.f32 0.0, %v364
  %v366 = vpop.f32.mrb[0].mxu0
  %367 = vmatprep.mubr.f32.mxu0 0.0
  %368 = vmatmul.mubr.f32.gmra.mrb[0].mxu0 %v62
  %v369 = vpop.f32.mrb[0].mxu0
  %v370 = vadd.f32 0.0, %v369
  %v371 = vpop.f32.mrb[0].mxu0
  %372 = vmatprep.mubr.f32.mxu0 0.0
  %373 = vmatmul.mubr.f32.gmra.mrb[0].mxu0 %v65
  %v374 = vpop.f32.mrb[0].mxu0
  %v375 = vadd.f32 0.0, %v374
  %v376 = vpop.f32.mrb[0].mxu0
  %377 = vdwg.mxu0
  %v379 = vlaneseq
  %v380 = vshrl.u32 %v379, 7
  %v381 = vsub.s32 0, %v380
  %v382 = vrot.slane %v292, %v381
  %v385 = vsel %vm54, %v360, 0
  %v388 = vsel %vm54, %v365, 0
  %v391 = vsel %vm54, %v370, 0
  %v394 = vsel %vm54, %v375, 0
  %396 = vmatprep.subr.mxu0 0.0
  %397 = vmatpush1.msra.mxu0 %v288
  %398 = vmatprep.subr.mxu0 0.0
  %399 = vmatpush1.msra.mxu0 %v289
  %400 = vmatprep.subr.mxu0 0.0
  %401 = vmatpush1.msra.mxu0 %v290
  %402 = vmatprep.subr.mxu0 0.0
  %403 = vmatpush1.msra.mxu0 %v291
  %404 = vmatprep.subr.mxu0 0.0
  %405 = vmatpush1.msra.mxu0 0.0
  %406 = vmatprep.subr.mxu0 0.0
  %407 = vmatpush1.msra.mxu0 0.0
  %408 = vmatprep.subr.mxu0 0.0
  %409 = vmatpush1.msra.mxu0 0.0
  %410 = vmatprep.subr.mxu0 0.0
  %411 = vmatpush1.msra.mxu0 0.0
  %412 = vmatprep.subr.mxu0 0.0
  %413 = vmatpush1.msra.mxu0 0.0
  %414 = vmatprep.subr.mxu0 0.0
  %415 = vmatpush1.msra.mxu0 0.0
  %416 = vmatprep.subr.mxu0 0.0
  %417 = vmatpush1.msra.mxu0 0.0
  %418 = vmatprep.subr.mxu0 0.0
  %419 = vmatpush1.msra.mxu0 0.0
  %420 = vmatprep.subr.mxu0 0.0
  %421 = vmatpush1.msra.mxu0 0.0
  %422 = vmatprep.subr.mxu0 0.0
  %423 = vmatpush1.msra.mxu0 0.0
  %424 = vmatprep.subr.mxu0 0.0
  %425 = vmatpush1.msra.mxu0 0.0
  %426 = vmatprep.subr.mxu0 0.0
  %427 = vmatpush1.msra.mxu0 0.0
  %428 = vmatprep.subr.mxu0 0.0
  %429 = vmatpush1.msra.mxu0 0.0
  %430 = vmatprep.subr.mxu0 0.0
  %431 = vmatpush1.msra.mxu0 0.0
  %432 = vmatprep.subr.mxu0 0.0
  %433 = vmatpush1.msra.mxu0 0.0
  %434 = vmatprep.subr.mxu0 0.0
  %435 = vmatpush1.msra.mxu0 0.0
  %436 = vmatprep.subr.mxu0 0.0
  %437 = vmatpush1.msra.mxu0 0.0
  %438 = vmatprep.subr.mxu0 0.0
  %439 = vmatpush1.msra.mxu0 0.0
  %440 = vmatprep.subr.mxu0 0.0
  %441 = vmatpush1.msra.mxu0 0.0
  %442 = vmatprep.subr.mxu0 0.0
  %443 = vmatpush1.msra.mxu0 0.0
  %444 = vmatprep.subr.mxu0 0.0
  %445 = vmatpush1.msra.mxu0 0.0
  %446 = vmatprep.subr.mxu0 0.0
  %447 = vmatpush1.msra.mxu0 0.0
  %448 = vmatprep.subr.mxu0 0.0
  %449 = vmatpush1.msra.mxu0 0.0
  %450 = vmatprep.subr.mxu0 0.0
  %451 = vmatpush1.msra.mxu0 0.0
  %452 = vmatprep.subr.mxu0 0.0
  %453 = vmatpush1.msra.mxu0 0.0
  %454 = vmatprep.subr.mxu0 0.0
  %455 = vmatpush1.msra.mxu0 0.0
  %456 = vmatprep.subr.mxu0 0.0
  %457 = vmatpush1.msra.mxu0 0.0
  %458 = vmatprep.subr.mxu0 0.0
  %459 = vmatpush1.msra.mxu0 0.0
  %460 = vmatprep.mubr.f32.mxu0 0.0
  %461 = vmatmul.mubr.f32.gmra.mrb[0].mxu0 %v385
  %v462 = vpop.f32.mrb[0].mxu0
  %v463 = vadd.f32 %v382, %v462
  %v464 = vpop.f32.mrb[0].mxu0
  %465 = vmatprep.mubr.f32.mxu0 0.0
  %466 = vmatmul.mubr.f32.gmra.mrb[0].mxu0 %v388
  %v467 = vpop.f32.mrb[0].mxu0
  %v468 = vadd.f32 %v382, %v467
  %v469 = vpop.f32.mrb[0].mxu0
  %470 = vmatprep.mubr.f32.mxu0 0.0
  %471 = vmatmul.mubr.f32.gmra.mrb[0].mxu0 %v391
  %v472 = vpop.f32.mrb[0].mxu0
  %v473 = vadd.f32 %v382, %v472
  %v474 = vpop.f32.mrb[0].mxu0
  %475 = vmatprep.mubr.f32.mxu0 0.0
  %476 = vmatmul.mubr.f32.gmra.mrb[0].mxu0 %v394
  %v477 = vpop.f32.mrb[0].mxu0
  %v478 = vadd.f32 %v382, %v477
  %v479 = vpop.f32.mrb[0].mxu0
  %480 = vdwg.mxu0
  %v481 = vmul.f32 %v463, %v263
  %v482 = vmul.f32 %v468, %v268
  %v483 = vmul.f32 %v473, %v273
  %v484 = vmul.f32 %v478, %v278
  %v485 = vtanh.pop %v481
  %v486 = vtanh.pop %v482
  %v487 = vtanh.pop %v483
  %v488 = vtanh.pop %v484
  %v489 = vld [vmem:[%s7] sm:$0xff]
  %v490 = vld [vmem:[%s7 + $0x8] sm:$0xff]
  %v491 = vld [vmem:[%s7 + $0x10] sm:$0xff]
  %v492 = vld [vmem:[%s7 + $0x18] sm:$0xff]
  %v493 = vld [vmem:[%s8] sm:$0x1]
  %494 = vmatprep.subr.mxu0 0.0
  %495 = vmatpush1.msra.mxu0 %v485
  %496 = vmatprep.subr.mxu0 0.0
  %497 = vmatpush1.msra.mxu0 %v486
  %498 = vmatprep.subr.mxu0 0.0
  %499 = vmatpush1.msra.mxu0 %v487
  %500 = vmatprep.subr.mxu0 0.0
  %501 = vmatpush1.msra.mxu0 %v488
  %502 = vmatprep.subr.mxu0 0.0
  %503 = vmatpush1.msra.mxu0 0.0
  %504 = vmatprep.subr.mxu0 0.0
  %505 = vmatpush1.msra.mxu0 0.0
  %506 = vmatprep.subr.mxu0 0.0
  %507 = vmatpush1.msra.mxu0 0.0
  %508 = vmatprep.subr.mxu0 0.0
  %509 = vmatpush1.msra.mxu0 0.0
  %510 = vmatprep.subr.mxu0 0.0
  %511 = vmatpush1.msra.mxu0 0.0
  %512 = vmatprep.subr.mxu0 0.0
  %513 = vmatpush1.msra.mxu0 0.0
  %514 = vmatprep.subr.mxu0 0.0
  %515 = vmatpush1.msra.mxu0 0.0
  %516 = vmatprep.subr.mxu0 0.0
  %517 = vmatpush1.msra.mxu0 0.0
  %518 = vmatprep.subr.mxu0 0.0
  %519 = vmatpush1.msra.mxu0 0.0
  %520 = vmatprep.subr.mxu0 0.0
  %521 = vmatpush1.msra.mxu0 0.0
  %522 = vmatprep.subr.mxu0 0.0
  %523 = vmatpush1.msra.mxu0 0.0
  %524 = vmatprep.subr.mxu0 0.0
  %525 = vmatpush1.msra.mxu0 0.0
  %526 = vmatprep.subr.mxu0 0.0
  %527 = vmatpush1.msra.mxu0 0.0
  %528 = vmatprep.subr.mxu0 0.0
  %529 = vmatpush1.msra.mxu0 0.0
  %530 = vmatprep.subr.mxu0 0.0
  %531 = vmatpush1.msra.mxu0 0.0
  %532 = vmatprep.subr.mxu0 0.0
  %533 = vmatpush1.msra.mxu0 0.0
  %534 = vmatprep.subr.mxu0 0.0
  %535 = vmatpush1.msra.mxu0 0.0
  %536 = vmatprep.subr.mxu0 0.0
  %537 = vmatpush1.msra.mxu0 0.0
  %538 = vmatprep.subr.mxu0 0.0
  %539 = vmatpush1.msra.mxu0 0.0
  %540 = vmatprep.subr.mxu0 0.0
  %541 = vmatpush1.msra.mxu0 0.0
  %542 = vmatprep.subr.mxu0 0.0
  %543 = vmatpush1.msra.mxu0 0.0
  %544 = vmatprep.subr.mxu0 0.0
  %545 = vmatpush1.msra.mxu0 0.0
  %546 = vmatprep.subr.mxu0 0.0
  %547 = vmatpush1.msra.mxu0 0.0
  %548 = vmatprep.subr.mxu0 0.0
  %549 = vmatpush1.msra.mxu0 0.0
  %550 = vmatprep.subr.mxu0 0.0
  %551 = vmatpush1.msra.mxu0 0.0
  %552 = vmatprep.subr.mxu0 0.0
  %553 = vmatpush1.msra.mxu0 0.0
  %554 = vmatprep.subr.mxu0 0.0
  %555 = vmatpush1.msra.mxu0 0.0
  %556 = vmatprep.subr.mxu0 0.0
  %557 = vmatpush1.msra.mxu0 0.0
  %558 = vmatprep.mubr.f32.mxu0 0.0
  %559 = vmatmul.mubr.f32.gmra.mrb[0].mxu0 %v56
  %v560 = vpop.f32.mrb[0].mxu0
  %v561 = vadd.f32 0.0, %v560
  %v562 = vpop.f32.mrb[0].mxu0
  %563 = vmatprep.mubr.f32.mxu0 0.0
  %564 = vmatmul.mubr.f32.gmra.mrb[0].mxu0 %v59
  %v565 = vpop.f32.mrb[0].mxu0
  %v566 = vadd.f32 0.0, %v565
  %v567 = vpop.f32.mrb[0].mxu0
  %568 = vmatprep.mubr.f32.mxu0 0.0
  %569 = vmatmul.mubr.f32.gmra.mrb[0].mxu0 %v62
  %v570 = vpop.f32.mrb[0].mxu0
  %v571 = vadd.f32 0.0, %v570
  %v572 = vpop.f32.mrb[0].mxu0
  %573 = vmatprep.mubr.f32.mxu0 0.0
  %574 = vmatmul.mubr.f32.gmra.mrb[0].mxu0 %v65
  %v575 = vpop.f32.mrb[0].mxu0
  %v576 = vadd.f32 0.0, %v575
  %v577 = vpop.f32.mrb[0].mxu0
  %578 = vdwg.mxu0
  %v580 = vlaneseq
  %v581 = vshrl.u32 %v580, 7
  %v582 = vsub.s32 0, %v581
  %v583 = vrot.slane %v493, %v582
  %v586 = vsel %vm54, %v561, 0
  %v589 = vsel %vm54, %v566, 0
  %v592 = vsel %vm54, %v571, 0
  %v595 = vsel %vm54, %v576, 0
  %597 = vmatprep.subr.mxu0 0.0
  %598 = vmatpush1.msra.mxu0 %v489
  %599 = vmatprep.subr.mxu0 0.0
  %600 = vmatpush1.msra.mxu0 %v490
  %601 = vmatprep.subr.mxu0 0.0
  %602 = vmatpush1.msra.mxu0 %v491
  %603 = vmatprep.subr.mxu0 0.0
  %604 = vmatpush1.msra.mxu0 %v492
  %605 = vmatprep.subr.mxu0 0.0
  %606 = vmatpush1.msra.mxu0 0.0
  %607 = vmatprep.subr.mxu0 0.0
  %608 = vmatpush1.msra.mxu0 0.0
  %609 = vmatprep.subr.mxu0 0.0
  %610 = vmatpush1.msra.mxu0 0.0
  %611 = vmatprep.subr.mxu0 0.0
  %612 = vmatpush1.msra.mxu0 0.0
  %613 = vmatprep.subr.mxu0 0.0
  %614 = vmatpush1.msra.mxu0 0.0
  %615 = vmatprep.subr.mxu0 0.0
  %616 = vmatpush1.msra.mxu0 0.0
  %617 = vmatprep.subr.mxu0 0.0
  %618 = vmatpush1.msra.mxu0 0.0
  %619 = vmatprep.subr.mxu0 0.0
  %620 = vmatpush1.msra.mxu0 0.0
  %621 = vmatprep.subr.mxu0 0.0
  %622 = vmatpush1.msra.mxu0 0.0
  %623 = vmatprep.subr.mxu0 0.0
  %624 = vmatpush1.msra.mxu0 0.0
  %625 = vmatprep.subr.mxu0 0.0
  %626 = vmatpush1.msra.mxu0 0.0
  %627 = vmatprep.subr.mxu0 0.0
  %628 = vmatpush1.msra.mxu0 0.0
  %629 = vmatprep.subr.mxu0 0.0
  %630 = vmatpush1.msra.mxu0 0.0
  %631 = vmatprep.subr.mxu0 0.0
  %632 = vmatpush1.msra.mxu0 0.0
  %633 = vmatprep.subr.mxu0 0.0
  %634 = vmatpush1.msra.mxu0 0.0
  %635 = vmatprep.subr.mxu0 0.0
  %636 = vmatpush1.msra.mxu0 0.0
  %637 = vmatprep.subr.mxu0 0.0
  %638 = vmatpush1.msra.mxu0 0.0
  %639 = vmatprep.subr.mxu0 0.0
  %640 = vmatpush1.msra.mxu0 0.0
  %641 = vmatprep.subr.mxu0 0.0
  %642 = vmatpush1.msra.mxu0 0.0
  %643 = vmatprep.subr.mxu0 0.0
  %644 = vmatpush1.msra.mxu0 0.0
  %645 = vmatprep.subr.mxu0 0.0
  %646 = vmatpush1.msra.mxu0 0.0
  %647 = vmatprep.subr.mxu0 0.0
  %648 = vmatpush1.msra.mxu0 0.0
  %649 = vmatprep.subr.mxu0 0.0
  %650 = vmatpush1.msra.mxu0 0.0
  %651 = vmatprep.subr.mxu0 0.0
  %652 = vmatpush1.msra.mxu0 0.0
  %653 = vmatprep.subr.mxu0 0.0
  %654 = vmatpush1.msra.mxu0 0.0
  %655 = vmatprep.subr.mxu0 0.0
  %656 = vmatpush1.msra.mxu0 0.0
  %657 = vmatprep.subr.mxu0 0.0
  %658 = vmatpush1.msra.mxu0 0.0
  %659 = vmatprep.subr.mxu0 0.0
  %660 = vmatpush1.msra.mxu0 0.0
  %661 = vmatprep.mubr.f32.mxu0 0.0
  %662 = vmatmul.mubr.f32.gmra.mrb[0].mxu0 %v586
  %v663 = vpop.f32.mrb[0].mxu0
  %v664 = vadd.f32 %v583, %v663
  %v665 = vpop.f32.mrb[0].mxu0
  %666 = vmatprep.mubr.f32.mxu0 0.0
  %667 = vmatmul.mubr.f32.gmra.mrb[0].mxu0 %v589
  %v668 = vpop.f32.mrb[0].mxu0
  %v669 = vadd.f32 %v583, %v668
  %v670 = vpop.f32.mrb[0].mxu0
  %671 = vmatprep.mubr.f32.mxu0 0.0
  %672 = vmatmul.mubr.f32.gmra.mrb[0].mxu0 %v592
  %v673 = vpop.f32.mrb[0].mxu0
  %v674 = vadd.f32 %v583, %v673
  %v675 = vpop.f32.mrb[0].mxu0
  %676 = vmatprep.mubr.f32.mxu0 0.0
  %677 = vmatmul.mubr.f32.gmra.mrb[0].mxu0 %v595
  %v678 = vpop.f32.mrb[0].mxu0
  %v679 = vadd.f32 %v583, %v678
  %v680 = vpop.f32.mrb[0].mxu0
  %681 = vdwg.mxu0
  %v682 = vmul.f32 %v664, %v263
  %v683 = vmul.f32 %v669, %v268
  %v684 = vmul.f32 %v674, %v273
  %v685 = vmul.f32 %v679, %v278
  %v686 = vtanh.pop %v682
  %v687 = vtanh.pop %v683
  %v688 = vtanh.pop %v684
  %v689 = vtanh.pop %v685
  %690 = vmatprep.subr.mxu0 0.0
  %691 = vmatpush1.msra.mxu0 %v686
  %692 = vmatprep.subr.mxu0 0.0
  %693 = vmatpush1.msra.mxu0 %v687
  %694 = vmatprep.subr.mxu0 0.0
  %695 = vmatpush1.msra.mxu0 %v688
  %696 = vmatprep.subr.mxu0 0.0
  %697 = vmatpush1.msra.mxu0 %v689
  %698 = vmatprep.subr.mxu0 0.0
  %699 = vmatpush1.msra.mxu0 0.0
  %700 = vmatprep.subr.mxu0 0.0
  %701 = vmatpush1.msra.mxu0 0.0
  %702 = vmatprep.subr.mxu0 0.0
  %703 = vmatpush1.msra.mxu0 0.0
  %704 = vmatprep.subr.mxu0 0.0
  %705 = vmatpush1.msra.mxu0 0.0
  %706 = vmatprep.subr.mxu0 0.0
  %707 = vmatpush1.msra.mxu0 0.0
  %708 = vmatprep.subr.mxu0 0.0
  %709 = vmatpush1.msra.mxu0 0.0
  %710 = vmatprep.subr.mxu0 0.0
  %711 = vmatpush1.msra.mxu0 0.0
  %712 = vmatprep.subr.mxu0 0.0
  %713 = vmatpush1.msra.mxu0 0.0
  %714 = vmatprep.subr.mxu0 0.0
  %715 = vmatpush1.msra.mxu0 0.0
  %716 = vmatprep.subr.mxu0 0.0
  %717 = vmatpush1.msra.mxu0 0.0
  %718 = vmatprep.subr.mxu0 0.0
  %719 = vmatpush1.msra.mxu0 0.0
  %720 = vmatprep.subr.mxu0 0.0
  %721 = vmatpush1.msra.mxu0 0.0
  %722 = vmatprep.subr.mxu0 0.0
  %723 = vmatpush1.msra.mxu0 0.0
  %724 = vmatprep.subr.mxu0 0.0
  %725 = vmatpush1.msra.mxu0 0.0
  %726 = vmatprep.subr.mxu0 0.0
  %727 = vmatpush1.msra.mxu0 0.0
  %728 = vmatprep.subr.mxu0 0.0
  %729 = vmatpush1.msra.mxu0 0.0
  %730 = vmatprep.subr.mxu0 0.0
  %731 = vmatpush1.msra.mxu0 0.0
  %732 = vmatprep.subr.mxu0 0.0
  %733 = vmatpush1.msra.mxu0 0.0
  %734 = vmatprep.subr.mxu0 0.0
  %735 = vmatpush1.msra.mxu0 0.0
  %736 = vmatprep.subr.mxu0 0.0
  %737 = vmatpush1.msra.mxu0 0.0
  %738 = vmatprep.subr.mxu0 0.0
  %739 = vmatpush1.msra.mxu0 0.0
  %740 = vmatprep.subr.mxu0 0.0
  %741 = vmatpush1.msra.mxu0 0.0
  %742 = vmatprep.subr.mxu0 0.0
  %743 = vmatpush1.msra.mxu0 0.0
  %744 = vmatprep.subr.mxu0 0.0
  %745 = vmatpush1.msra.mxu0 0.0
  %746 = vmatprep.subr.mxu0 0.0
  %747 = vmatpush1.msra.mxu0 0.0
  %748 = vmatprep.subr.mxu0 0.0
  %749 = vmatpush1.msra.mxu0 0.0
  %750 = vmatprep.subr.mxu0 0.0
  %751 = vmatpush1.msra.mxu0 0.0
  %752 = vmatprep.subr.mxu0 0.0
  %753 = vmatpush1.msra.mxu0 0.0
  %754 = vmatprep.mubr.f32.mxu0 0.0
  %755 = vmatmul.mubr.f32.gmra.mrb[0].mxu0 %v56
  %v756 = vpop.f32.mrb[0].mxu0
  %v757 = vadd.f32 0.0, %v756
  %v758 = vpop.f32.mrb[0].mxu0
  %759 = vmatprep.mubr.f32.mxu0 0.0
  %760 = vmatmul.mubr.f32.gmra.mrb[0].mxu0 %v59
  %v761 = vpop.f32.mrb[0].mxu0
  %v762 = vadd.f32 0.0, %v761
  %v763 = vpop.f32.mrb[0].mxu0
  %764 = vmatprep.mubr.f32.mxu0 0.0
  %765 = vmatmul.mubr.f32.gmra.mrb[0].mxu0 %v62
  %v766 = vpop.f32.mrb[0].mxu0
  %v767 = vadd.f32 0.0, %v766
  %v768 = vpop.f32.mrb[0].mxu0
  %769 = vmatprep.mubr.f32.mxu0 0.0
  %770 = vmatmul.mubr.f32.gmra.mrb[0].mxu0 %v65
  %v771 = vpop.f32.mrb[0].mxu0
  %v772 = vadd.f32 0.0, %v771
  %v773 = vpop.f32.mrb[0].mxu0
  %774 = vdwg.mxu0
  %v775 = vld [vmem:[%s9] sm:$0x1]
  %v777 = vlaneseq
  %v778 = vshrl.u32 %v777, 7
  %v779 = vsub.s32 0, %v778
  %v780 = vrot.slane %v775, %v779
  %v782 = vmul.f32 %v757, %v780
  %v783 = vmul.f32 %v762, %v780
  %v784 = vmul.f32 %v767, %v780
  %v785 = vmul.f32 %v772, %v780
  %v786 = vsel %vm54, %v782, 0.0
  %787 = vadd.xlane.f32.xlu0 %v786
  %v788 = vpop.xlane.xlu0 %787
  %v789 = vsel %vm54, %v783, 0.0
  %790 = vadd.xlane.f32.xlu0 %v789
  %v791 = vpop.xlane.xlu0 %790
  %v792 = vsel %vm54, %v784, 0.0
  %793 = vadd.xlane.f32.xlu0 %v792
  %v794 = vpop.xlane.xlu0 %793
  %v795 = vsel %vm54, %v785, 0.0
  %796 = vadd.xlane.f32.xlu0 %v795
  %v797 = vpop.xlane.xlu0 %796
  %v798 = vld [vmem:[#allocation2] sm:$0x1]
  %v800 = vlaneseq
  %v801 = vshrl.u32 %v800, 7
  %v802 = vsub.s32 0, %v801
  %v803 = vrot.slane %v798, %v802
  %v805 = vadd.f32 %v788, %v803
  %v806 = vadd.f32 %v791, %v803
  %v807 = vadd.f32 %v794, %v803
  %v808 = vadd.f32 %v797, %v803
  %v809 = vmul.f32 %v805, %v44
  %v810 = vmul.f32 %v806, %v45
  %v811 = vmul.f32 %v807, %v46
  %v812 = vmul.f32 %v808, %v47
  %v813 = vtanh.pop %v809
  %v814 = vtanh.pop %v810
  %v815 = vtanh.pop %v811
  %v816 = vtanh.pop %v812
  %v817 = vlaneseq
  %v818 = vand.u32 %v817, 127
  %vm819 = vcmp.eq.s32.totalorder %v818, 0
  %821 = vset.pattern.permute.xlu0 0
  %822 = vperm.xlu0 %821, %v813
  %v823 = vpop.permute.xlu0 %822
  %826 = vset.pattern.permute.xlu0 0
  %827 = vperm.xlu0 %826, %v814
  %v828 = vpop.permute.xlu0 %827
  %831 = vset.pattern.permute.xlu0 0
  %832 = vperm.xlu0 %831, %v815
  %v833 = vpop.permute.xlu0 %832
  %836 = vset.pattern.permute.xlu0 0
  %837 = vperm.xlu0 %836, %v816
  %v838 = vpop.permute.xlu0 %837
  %v840 = vsel %vm819, %v823, 0.0
  %v841 = vsel %vm819, %v828, 0.0
  %v842 = vsel %vm819, %v833, 0.0
  %v843 = vsel %vm819, %v838, 0.0
  %848 = vrot.lane.b32.xlu0 %v485, 32
  %v849 = vpop.permute.xlu0 %848
  %850 = vrot.lane.b32.xlu0 %v486, 32
  %v851 = vpop.permute.xlu0 %850
  %852 = vrot.lane.b32.xlu0 %v487, 32
  %v853 = vpop.permute.xlu0 %852
  %854 = vrot.lane.b32.xlu0 %v488, 32
  %v855 = vpop.permute.xlu0 %854
  %864 = vrot.lane.b32.xlu0 %v686, 64
  %v865 = vpop.permute.xlu0 %864
  %866 = vrot.lane.b32.xlu0 %v687, 64
  %v867 = vpop.permute.xlu0 %866
  %868 = vrot.lane.b32.xlu0 %v688, 64
  %v869 = vpop.permute.xlu0 %868
  %870 = vrot.lane.b32.xlu0 %v689, 64
  %v871 = vpop.permute.xlu0 %870
  %880 = vrot.lane.b32.xlu0 %v840, 96
  %v881 = vpop.permute.xlu0 %880
  %882 = vrot.lane.b32.xlu0 %v841, 96
  %v883 = vpop.permute.xlu0 %882
  %884 = vrot.lane.b32.xlu0 %v842, 96
  %v885 = vpop.permute.xlu0 %884
  %886 = vrot.lane.b32.xlu0 %v843, 96
  %v887 = vpop.permute.xlu0 %886
  %v892 = vsel %vm54, %v284, %v849
  %v893 = vsel %vm54, %v285, %v851
  %v894 = vsel %vm54, %v286, %v853
  %v895 = vsel %vm54, %v287, %v855
  %vm896 = vcmask 523264
  %v897 = vsel %vm896, %v892, %v865
  %v898 = vsel %vm896, %v893, %v867
  %v899 = vsel %vm896, %v894, %v869
  %v900 = vsel %vm896, %v895, %v871
  %vm901 = vcmask 785408
  %v902 = vsel %vm901, %v897, %v881
  %v903 = vsel %vm901, %v898, %v883
  %v904 = vsel %vm901, %v899, %v885
  %v905 = vsel %vm901, %v900, %v887
  %906 = vst [vmem:[%s11] sm:$0xff] %v902
  %907 = vst [vmem:[%s11 + $0x8] sm:$0xff] %v903
  %908 = vst [vmem:[%s11 + $0x10] sm:$0xff] %v904
  %909 = vst [vmem:[%s11 + $0x18] sm:$0xff] %v905
  // Predicated region
  $region46: #{classifier_forward.2} parent=0 // pred_check
    _
  $region47: #{classifier_forward.2} parent=0 // pred_check_branch
    %911 = sbr.rel (0) target = $region49
  $region48: #{classifier_forward.2} parent=0 // pred_region
    _
  $region49: #{classifier_forward.2} parent=0 // pred_fallthru
    _
  // Predicated region
  $region50: #{classifier_forward.2} parent=0 // pred_check
    _
  $region51: #{classifier_forward.2} parent=0 // pred_check_branch
    %913 = sbr.rel (0) target = $region53
  $region52: #{classifier_forward.2} parent=0 // pred_region
    _
  $region53: #{classifier_forward.2} parent=0 // pred_fallthru
    _

// kernel: classifier_forward.3
$region0: #{classifier_forward.3}
  #allocation0 [shape = 'u32[]', space=smem, size = 0x4, offset = 0x4, fixed_abs, tag = 'smem constant byte address 0x4 - core index']
  #allocation1 [shape = 'u32[144,128]{1,0:T(1,128)}', space=vmem, size = 0x12000, scoped, tag = 'internal scratch']
  %s0 = inlined_call_operand.vmem [shape: f32[2,10,128], index: 0, kind: input, shape index: {}]
  %s1 = inlined_call_operand.vmem [shape: f32[128,16], index: 1, kind: input, shape index: {}]
  %s2 = inlined_call_operand.vmem [shape: f32[1,16], index: 2, kind: input, shape index: {}]
  %s3 = inlined_call_operand.vmem [shape: f32[5,16,32], index: 3, kind: input, shape index: {}]
  %s4 = inlined_call_operand.vmem [shape: f32[1,32], index: 4, kind: input, shape index: {}]
  %s5 = inlined_call_operand.vmem [shape: f32[32,32], index: 5, kind: input, shape index: {}]
  %s6 = inlined_call_operand.vmem [shape: f32[1,32], index: 6, kind: input, shape index: {}]
  %s7 = inlined_call_operand.vmem [shape: f32[32,2], index: 7, kind: input, shape index: {}]
  %s8 = inlined_call_operand.vmem [shape: f32[1,2], index: 8, kind: input, shape index: {}]
  %s9 = inlined_call_operand.vmem [shape: s32[2,1], index: 9, kind: input, shape index: {}]
  %s10 = inlined_call_operand.hbm [shape: f32[2,2], index: 10, kind: output, shape index: {0}]
  %s11 = inlined_call_operand.hbm [shape: f32[1,1], index: 11, kind: output, shape index: {1}]
  %12 = xla_tuple %s10, %s11
  %s13 = sld [smem:[#allocation0]]
  $region58: #{classifier_forward.3} parent=0
    _
  %s15 = ssub.s32 1, %s13
  %s16 = scalar_select 0, %s15, %s13
  $region1: #{classifier_forward.3} parent=0
    #allocation2 [shape = 'u8[1024]{0}', space=vmem, size = 0x400, scoped, tag = 'output window, operand 0, single buffered']
    #allocation3 [shape = 's32[1]{0}', space=sflag, size = 0x4, scoped, tag = 'scoped memory for classifier_forward.3']
    #allocation4 [shape = 'u8[512]{0}', space=vmem, size = 0x400, scoped, tag = 'output window, operand 1, single buffered']
    #allocation5 [shape = 's32[1]{0}', space=sflag, size = 0x4, scoped, tag = 'scoped memory for classifier_forward.3']
    %17 = vsyncpa [#allocation3], 0
    %18 = vsyncpa [#allocation5], 0
    // Predicated region
    $region2: #{classifier_forward.3} parent=1 // pred_check
      _
    $region3: #{classifier_forward.3} parent=1 // pred_check_branch
      %20 = sbr.rel (0) target = $region5
    $region4: #{classifier_forward.3} parent=1 // pred_region
      _
    $region5: #{classifier_forward.3} parent=1 // pred_fallthru
      _
    // Predicated region
    $region6: #{classifier_forward.3} parent=1 // pred_check
      _
    $region7: #{classifier_forward.3} parent=1 // pred_check_branch
      %22 = sbr.rel (0) target = $region9
    $region8: #{classifier_forward.3} parent=1 // pred_region
      _
    $region9: #{classifier_forward.3} parent=1 // pred_fallthru
      _
    // Predicated region
    $region10: #{classifier_forward.3} parent=1 // pred_check
      _
    $region11: #{classifier_forward.3} parent=1 // pred_check_branch
      %24 = sbr.rel (0) target = $region13
    $region12: #{classifier_forward.3} parent=1 // pred_region
      _
    $region13: #{classifier_forward.3} parent=1 // pred_fallthru
      _
    // Predicated region
    $region14: #{classifier_forward.3} parent=1 // pred_check
      _
    $region15: #{classifier_forward.3} parent=1 // pred_check_branch
      %26 = sbr.rel (0) target = $region17
    $region16: #{classifier_forward.3} parent=1 // pred_region
      _
    $region17: #{classifier_forward.3} parent=1 // pred_fallthru
      _
    // Predicated region
    $region18: #{classifier_forward.3} parent=1 // pred_check
      _
    $region19: #{classifier_forward.3} parent=1 // pred_check_branch
      %28 = sbr.rel (0) target = $region21
    $region20: #{classifier_forward.3} parent=1 // pred_region
      _
    $region21: #{classifier_forward.3} parent=1 // pred_fallthru
      _
    // Predicated region
    $region22: #{classifier_forward.3} parent=1 // pred_check
      _
    $region23: #{classifier_forward.3} parent=1 // pred_check_branch
      %30 = sbr.rel (0) target = $region25
    $region24: #{classifier_forward.3} parent=1 // pred_region
      _
    $region25: #{classifier_forward.3} parent=1 // pred_fallthru
      _
    // Predicated region
    $region26: #{classifier_forward.3} parent=1 // pred_check
      _
    $region27: #{classifier_forward.3} parent=1 // pred_check_branch
      %32 = sbr.rel (0) target = $region29
    $region28: #{classifier_forward.3} parent=1 // pred_region
      _
    $region29: #{classifier_forward.3} parent=1 // pred_fallthru
      _
    // Predicated region
    $region30: #{classifier_forward.3} parent=1 // pred_check
      _
    $region31: #{classifier_forward.3} parent=1 // pred_check_branch
      %34 = sbr.rel (0) target = $region33
    $region32: #{classifier_forward.3} parent=1 // pred_region
      _
    $region33: #{classifier_forward.3} parent=1 // pred_fallthru
      _
    // Predicated region
    $region34: #{classifier_forward.3} parent=1 // pred_check
      _
    $region35: #{classifier_forward.3} parent=1 // pred_check_branch
      %36 = sbr.rel (0) target = $region37
    $region36: #{classifier_forward.3} parent=1 // pred_region
      _
    $region37: #{classifier_forward.3} parent=1 // pred_fallthru
      _
    // Predicated region
    $region38: #{classifier_forward.3} parent=1 // pred_check
      _
    $region39: #{classifier_forward.3} parent=1 // pred_check_branch
      %38 = sbr.rel (0) target = $region41
    $region40: #{classifier_forward.3} parent=1 // pred_region
      _
    $region41: #{classifier_forward.3} parent=1 // pred_fallthru
      _
    %v39 = vld [vmem:[%s1] sm:$0xff]
    %v40 = vld [vmem:[%s1 + $0x8] sm:$0xff]
    %v41 = vld [vmem:[%s1 + $0x10] sm:$0xff]
    %v42 = vld [vmem:[%s1 + $0x18] sm:$0xff]
    %v43 = vld [vmem:[%s1 + $0x20] sm:$0xff]
    %v44 = vld [vmem:[%s1 + $0x28] sm:$0xff]
    %v45 = vld [vmem:[%s1 + $0x30] sm:$0xff]
    %v46 = vld [vmem:[%s1 + $0x38] sm:$0xff]
    %v47 = vld [vmem:[%s1 + $0x40] sm:$0xff]
    %v48 = vld [vmem:[%s1 + $0x48] sm:$0xff]
    %v49 = vld [vmem:[%s1 + $0x50] sm:$0xff]
    %v50 = vld [vmem:[%s1 + $0x58] sm:$0xff]
    %v51 = vld [vmem:[%s1 + $0x60] sm:$0xff]
    %v52 = vld [vmem:[%s1 + $0x68] sm:$0xff]
    %v53 = vld [vmem:[%s1 + $0x70] sm:$0xff]
    %v54 = vld [vmem:[%s1 + $0x78] sm:$0xff]
    %v55 = vld [vmem:[%s2] sm:$0x1]
    %v56 = vld [vmem:[%s4] sm:$0x1]
    %v57 = vld [vmem:[%s0] sm:$0xff]
    %v58 = vld [vmem:[%s0 + $0x8] sm:$0x3]
    %v60 = vlaneseq
    %v61 = vshrl.u32 %v60, 7
    %v62 = vsub.s32 0, %v61
    %v63 = vrot.slane %v55, %v62
    %65 = vmatprep.subr.mxu0 0.0
    %66 = vmatpush1.msra.mxu0 %v39
    %67 = vmatprep.subr.mxu0 0.0
    %68 = vmatpush1.msra.mxu0 %v40
    %69 = vmatprep.subr.mxu0 0.0
    %70 = vmatpush1.msra.mxu0 %v41
    %71 = vmatprep.subr.mxu0 0.0
    %72 = vmatpush1.msra.mxu0 %v42
    %73 = vmatprep.subr.mxu0 0.0
    %74 = vmatpush1.msra.mxu0 %v43
    %75 = vmatprep.subr.mxu0 0.0
    %76 = vmatpush1.msra.mxu0 %v44
    %77 = vmatprep.subr.mxu0 0.0
    %78 = vmatpush1.msra.mxu0 %v45
    %79 = vmatprep.subr.mxu0 0.0
    %80 = vmatpush1.msra.mxu0 %v46
    %81 = vmatprep.subr.mxu0 0.0
    %82 = vmatpush1.msra.mxu0 %v47
    %83 = vmatprep.subr.mxu0 0.0
    %84 = vmatpush1.msra.mxu0 %v48
    %85 = vmatprep.subr.mxu0 0.0
    %86 = vmatpush1.msra.mxu0 %v49
    %87 = vmatprep.subr.mxu0 0.0
    %88 = vmatpush1.msra.mxu0 %v50
    %89 = vmatprep.subr.mxu0 0.0
    %90 = vmatpush1.msra.mxu0 %v51
    %91 = vmatprep.subr.mxu0 0.0
    %92 = vmatpush1.msra.mxu0 %v52
    %93 = vmatprep.subr.mxu0 0.0
    %94 = vmatpush1.msra.mxu0 %v53
    %95 = vmatprep.subr.mxu0 0.0
    %96 = vmatpush1.msra.mxu0 %v54
    %97 = vmatprep.subr.mxu0 0.0
    %98 = vmatpush1.msra.mxu0 0.0
    %99 = vmatprep.subr.mxu0 0.0
    %100 = vmatpush1.msra.mxu0 0.0
    %101 = vmatprep.subr.mxu0 0.0
    %102 = vmatpush1.msra.mxu0 0.0
    %103 = vmatprep.subr.mxu0 0.0
    %104 = vmatpush1.msra.mxu0 0.0
    %105 = vmatprep.subr.mxu0 0.0
    %106 = vmatpush1.msra.mxu0 0.0
    %107 = vmatprep.subr.mxu0 0.0
    %108 = vmatpush1.msra.mxu0 0.0
    %109 = vmatprep.subr.mxu0 0.0
    %110 = vmatpush1.msra.mxu0 0.0
    %111 = vmatprep.subr.mxu0 0.0
    %112 = vmatpush1.msra.mxu0 0.0
    %113 = vmatprep.subr.mxu0 0.0
    %114 = vmatpush1.msra.mxu0 0.0
    %115 = vmatprep.subr.mxu0 0.0
    %116 = vmatpush1.msra.mxu0 0.0
    %117 = vmatprep.subr.mxu0 0.0
    %118 = vmatpush1.msra.mxu0 0.0
    %119 = vmatprep.subr.mxu0 0.0
    %120 = vmatpush1.msra.mxu0 0.0
    %121 = vmatprep.subr.mxu0 0.0
    %122 = vmatpush1.msra.mxu0 0.0
    %123 = vmatprep.subr.mxu0 0.0
    %124 = vmatpush1.msra.mxu0 0.0
    %125 = vmatprep.subr.mxu0 0.0
    %126 = vmatpush1.msra.mxu0 0.0
    %127 = vmatprep.subr.mxu0 0.0
    %128 = vmatpush1.msra.mxu0 0.0
    %129 = vmatprep.mubr.f32.mxu0 0.0
    %130 = vmatmul.mubr.f32.gmra.mrb[0].mxu0 %v57
    %v131 = vpop.f32.mrb[0].mxu0
    %v132 = vadd.f32 %v63, %v131
    %v133 = vpop.f32.mrb[0].mxu0
    %134 = vmatprep.mubr.f32.mxu0 0.0
    %135 = vmatmul.mubr.f32.gmra.mrb[0].mxu0 %v58
    %v136 = vpop.f32.mrb[0].mxu0
    %v137 = vadd.f32 %v63, %v136
    %v138 = vpop.f32.mrb[0].mxu0
    %139 = vdwg.mxu0
    %v140 = vmax.f32 %v132, 0.0
    %v141 = vmax.f32 %v137, 0.0
    %v143 = vrot.slane %v140, 1
    %v145 = vmax.f32 %v140, %v143
    %v147 = vrot.slane %v141, 1
    %v149 = vmax.f32 %v141, %v147
    %v150 = vld [vmem:[%s3] sm:$0xff]
    %v151 = vld [vmem:[%s3 + $0x8] sm:$0xff]
    %vm152 = vcmask 130048
    %v154 = vsel %vm152, %v145, 0
    %156 = vmatprep.subr.mxu0 0.0
    %157 = vmatpush1.msra.mxu0 %v150
    %158 = vmatprep.subr.mxu0 0.0
    %159 = vmatpush1.msra.mxu0 %v151
    %160 = vmatprep.subr.mxu0 0.0
    %161 = vmatpush1.msra.mxu0 0.0
    %162 = vmatprep.subr.mxu0 0.0
    %163 = vmatpush1.msra.mxu0 0.0
    %164 = vmatprep.subr.mxu0 0.0
    %165 = vmatpush1.msra.mxu0 0.0
    %166 = vmatprep.subr.mxu0 0.0
    %167 = vmatpush1.msra.mxu0 0.0
    %168 = vmatprep.subr.mxu0 0.0
    %169 = vmatpush1.msra.mxu0 0.0
    %170 = vmatprep.subr.mxu0 0.0
    %171 = vmatpush1.msra.mxu0 0.0
    %172 = vmatprep.subr.mxu0 0.0
    %173 = vmatpush1.msra.mxu0 0.0
    %174 = vmatprep.subr.mxu0 0.0
    %175 = vmatpush1.msra.mxu0 0.0
    %176 = vmatprep.subr.mxu0 0.0
    %177 = vmatpush1.msra.mxu0 0.0
    %178 = vmatprep.subr.mxu0 0.0
    %179 = vmatpush1.msra.mxu0 0.0
    %180 = vmatprep.subr.mxu0 0.0
    %181 = vmatpush1.msra.mxu0 0.0
    %182 = vmatprep.subr.mxu0 0.0
    %183 = vmatpush1.msra.mxu0 0.0
    %184 = vmatprep.subr.mxu0 0.0
    %185 = vmatpush1.msra.mxu0 0.0
    %186 = vmatprep.subr.mxu0 0.0
    %187 = vmatpush1.msra.mxu0 0.0
    %188 = vmatprep.subr.mxu0 0.0
    %189 = vmatpush1.msra.mxu0 0.0
    %190 = vmatprep.subr.mxu0 0.0
    %191 = vmatpush1.msra.mxu0 0.0
    %192 = vmatprep.subr.mxu0 0.0
    %193 = vmatpush1.msra.mxu0 0.0
    %194 = vmatprep.subr.mxu0 0.0
    %195 = vmatpush1.msra.mxu0 0.0
    %196 = vmatprep.subr.mxu0 0.0
    %197 = vmatpush1.msra.mxu0 0.0
    %198 = vmatprep.subr.mxu0 0.0
    %199 = vmatpush1.msra.mxu0 0.0
    %200 = vmatprep.subr.mxu0 0.0
    %201 = vmatpush1.msra.mxu0 0.0
    %202 = vmatprep.subr.mxu0 0.0
    %203 = vmatpush1.msra.mxu0 0.0
    %204 = vmatprep.subr.mxu0 0.0
    %205 = vmatpush1.msra.mxu0 0.0
    %206 = vmatprep.subr.mxu0 0.0
    %207 = vmatpush1.msra.mxu0 0.0
    %208 = vmatprep.subr.mxu0 0.0
    %209 = vmatpush1.msra.mxu0 0.0
    %210 = vmatprep.subr.mxu0 0.0
    %211 = vmatpush1.msra.mxu0 0.0
    %212 = vmatprep.subr.mxu0 0.0
    %213 = vmatpush1.msra.mxu0 0.0
    %214 = vmatprep.subr.mxu0 0.0
    %215 = vmatpush1.msra.mxu0 0.0
    %216 = vmatprep.subr.mxu0 0.0
    %217 = vmatpush1.msra.mxu0 0.0
    %218 = vmatprep.subr.mxu0 0.0
    %219 = vmatpush1.msra.mxu0 0.0
    %220 = vmatprep.mubr.f32.mxu0 0.0
    %221 = vmatmul.mubr.f32.gmra.mrb[0].mxu0 %v154
    %v222 = vpop.f32.mrb[0].mxu0
    %v223 = vadd.f32 0.0, %v222
    %v224 = vpop.f32.mrb[0].mxu0
    %225 = vdwg.mxu0
    %v226 = vadd.f32 %v56, %v223
    %s227 = scalar_lea.vmem %s3, 16
    %v228 = vld [vmem:[%s227] sm:$0xff]
    %v229 = vld [vmem:[%s227 + $0x8] sm:$0xff]
    %v230 = vrot.slane %v145, 2
    %v231 = vsel %vm152, %v230, 0
    %233 = vmatprep.subr.mxu0 0.0
    %234 = vmatpush1.msra.mxu0 %v228
    %235 = vmatprep.subr.mxu0 0.0
    %236 = vmatpush1.msra.mxu0 %v229
    %237 = vmatprep.subr.mxu0 0.0
    %238 = vmatpush1.msra.mxu0 0.0
    %239 = vmatprep.subr.mxu0 0.0
    %240 = vmatpush1.msra.mxu0 0.0
    %241 = vmatprep.subr.mxu0 0.0
    %242 = vmatpush1.msra.mxu0 0.0
    %243 = vmatprep.subr.mxu0 0.0
    %244 = vmatpush1.msra.mxu0 0.0
    %245 = vmatprep.subr.mxu0 0.0
    %246 = vmatpush1.msra.mxu0 0.0
    %247 = vmatprep.subr.mxu0 0.0
    %248 = vmatpush1.msra.mxu0 0.0
    %249 = vmatprep.subr.mxu0 0.0
    %250 = vmatpush1.msra.mxu0 0.0
    %251 = vmatprep.subr.mxu0 0.0
    %252 = vmatpush1.msra.mxu0 0.0
    %253 = vmatprep.subr.mxu0 0.0
    %254 = vmatpush1.msra.mxu0 0.0
    %255 = vmatprep.subr.mxu0 0.0
    %256 = vmatpush1.msra.mxu0 0.0
    %257 = vmatprep.subr.mxu0 0.0
    %258 = vmatpush1.msra.mxu0 0.0
    %259 = vmatprep.subr.mxu0 0.0
    %260 = vmatpush1.msra.mxu0 0.0
    %261 = vmatprep.subr.mxu0 0.0
    %262 = vmatpush1.msra.mxu0 0.0
    %263 = vmatprep.subr.mxu0 0.0
    %264 = vmatpush1.msra.mxu0 0.0
    %265 = vmatprep.subr.mxu0 0.0
    %266 = vmatpush1.msra.mxu0 0.0
    %267 = vmatprep.subr.mxu0 0.0
    %268 = vmatpush1.msra.mxu0 0.0
    %269 = vmatprep.subr.mxu0 0.0
    %270 = vmatpush1.msra.mxu0 0.0
    %271 = vmatprep.subr.mxu0 0.0
    %272 = vmatpush1.msra.mxu0 0.0
    %273 = vmatprep.subr.mxu0 0.0
    %274 = vmatpush1.msra.mxu0 0.0
    %275 = vmatprep.subr.mxu0 0.0
    %276 = vmatpush1.msra.mxu0 0.0
    %277 = vmatprep.subr.mxu0 0.0
    %278 = vmatpush1.msra.mxu0 0.0
    %279 = vmatprep.subr.mxu0 0.0
    %280 = vmatpush1.msra.mxu0 0.0
    %281 = vmatprep.subr.mxu0 0.0
    %282 = vmatpush1.msra.mxu0 0.0
    %283 = vmatprep.subr.mxu0 0.0
    %284 = vmatpush1.msra.mxu0 0.0
    %285 = vmatprep.subr.mxu0 0.0
    %286 = vmatpush1.msra.mxu0 0.0
    %287 = vmatprep.subr.mxu0 0.0
    %288 = vmatpush1.msra.mxu0 0.0
    %289 = vmatprep.subr.mxu0 0.0
    %290 = vmatpush1.msra.mxu0 0.0
    %291 = vmatprep.subr.mxu0 0.0
    %292 = vmatpush1.msra.mxu0 0.0
    %293 = vmatprep.subr.mxu0 0.0
    %294 = vmatpush1.msra.mxu0 0.0
    %295 = vmatprep.subr.mxu0 0.0
    %296 = vmatpush1.msra.mxu0 0.0
    %297 = vmatprep.mubr.f32.mxu0 0.0
    %298 = vmatmul.mubr.f32.gmra.mrb[0].mxu0 %v231
    %v299 = vpop.f32.mrb[0].mxu0
    %v300 = vadd.f32 0.0, %v299
    %v301 = vpop.f32.mrb[0].mxu0
    %302 = vdwg.mxu0
    %v303 = vadd.f32 %v226, %v300
    %s304 = scalar_lea.vmem %s3, 32
    %v305 = vld [vmem:[%s304] sm:$0xff]
    %v306 = vld [vmem:[%s304 + $0x8] sm:$0xff]
    %v307 = vrot.slane %v145, 4
    %v308 = vsel %vm152, %v307, 0
    %310 = vmatprep.subr.mxu0 0.0
    %311 = vmatpush1.msra.mxu0 %v305
    %312 = vmatprep.subr.mxu0 0.0
    %313 = vmatpush1.msra.mxu0 %v306
    %314 = vmatprep.subr.mxu0 0.0
    %315 = vmatpush1.msra.mxu0 0.0
    %316 = vmatprep.subr.mxu0 0.0
    %317 = vmatpush1.msra.mxu0 0.0
    %318 = vmatprep.subr.mxu0 0.0
    %319 = vmatpush1.msra.mxu0 0.0
    %320 = vmatprep.subr.mxu0 0.0
    %321 = vmatpush1.msra.mxu0 0.0
    %322 = vmatprep.subr.mxu0 0.0
    %323 = vmatpush1.msra.mxu0 0.0
    %324 = vmatprep.subr.mxu0 0.0
    %325 = vmatpush1.msra.mxu0 0.0
    %326 = vmatprep.subr.mxu0 0.0
    %327 = vmatpush1.msra.mxu0 0.0
    %328 = vmatprep.subr.mxu0 0.0
    %329 = vmatpush1.msra.mxu0 0.0
    %330 = vmatprep.subr.mxu0 0.0
    %331 = vmatpush1.msra.mxu0 0.0
    %332 = vmatprep.subr.mxu0 0.0
    %333 = vmatpush1.msra.mxu0 0.0
    %334 = vmatprep.subr.mxu0 0.0
    %335 = vmatpush1.msra.mxu0 0.0
    %336 = vmatprep.subr.mxu0 0.0
    %337 = vmatpush1.msra.mxu0 0.0
    %338 = vmatprep.subr.mxu0 0.0
    %339 = vmatpush1.msra.mxu0 0.0
    %340 = vmatprep.subr.mxu0 0.0
    %341 = vmatpush1.msra.mxu0 0.0
    %342 = vmatprep.subr.mxu0 0.0
    %343 = vmatpush1.msra.mxu0 0.0
    %344 = vmatprep.subr.mxu0 0.0
    %345 = vmatpush1.msra.mxu0 0.0
    %346 = vmatprep.subr.mxu0 0.0
    %347 = vmatpush1.msra.mxu0 0.0
    %348 = vmatprep.subr.mxu0 0.0
    %349 = vmatpush1.msra.mxu0 0.0
    %350 = vmatprep.subr.mxu0 0.0
    %351 = vmatpush1.msra.mxu0 0.0
    %352 = vmatprep.subr.mxu0 0.0
    %353 = vmatpush1.msra.mxu0 0.0
    %354 = vmatprep.subr.mxu0 0.0
    %355 = vmatpush1.msra.mxu0 0.0
    %356 = vmatprep.subr.mxu0 0.0
    %357 = vmatpush1.msra.mxu0 0.0
    %358 = vmatprep.subr.mxu0 0.0
    %359 = vmatpush1.msra.mxu0 0.0
    %360 = vmatprep.subr.mxu0 0.0
    %361 = vmatpush1.msra.mxu0 0.0
    %362 = vmatprep.subr.mxu0 0.0
    %363 = vmatpush1.msra.mxu0 0.0
    %364 = vmatprep.subr.mxu0 0.0
    %365 = vmatpush1.msra.mxu0 0.0
    %366 = vmatprep.subr.mxu0 0.0
    %367 = vmatpush1.msra.mxu0 0.0
    %368 = vmatprep.subr.mxu0 0.0
    %369 = vmatpush1.msra.mxu0 0.0
    %370 = vmatprep.subr.mxu0 0.0
    %371 = vmatpush1.msra.mxu0 0.0
    %372 = vmatprep.subr.mxu0 0.0
    %373 = vmatpush1.msra.mxu0 0.0
    %374 = vmatprep.mubr.f32.mxu0 0.0
    %375 = vmatmul.mubr.f32.gmra.mrb[0].mxu0 %v308
    %v376 = vpop.f32.mrb[0].mxu0
    %v377 = vadd.f32 0.0, %v376
    %v378 = vpop.f32.mrb[0].mxu0
    %379 = vdwg.mxu0
    %v380 = vadd.f32 %v303, %v377
    %s381 = scalar_lea.vmem %s3, 48
    %v382 = vld [vmem:[%s381] sm:$0xff]
    %v383 = vld [vmem:[%s381 + $0x8] sm:$0xff]
    %v384 = vrot.slane %v145, 6
    %v385 = vsel %vm152, %v384, 0
    %387 = vmatprep.subr.mxu0 0.0
    %388 = vmatpush1.msra.mxu0 %v382
    %389 = vmatprep.subr.mxu0 0.0
    %390 = vmatpush1.msra.mxu0 %v383
    %391 = vmatprep.subr.mxu0 0.0
    %392 = vmatpush1.msra.mxu0 0.0
    %393 = vmatprep.subr.mxu0 0.0
    %394 = vmatpush1.msra.mxu0 0.0
    %395 = vmatprep.subr.mxu0 0.0
    %396 = vmatpush1.msra.mxu0 0.0
    %397 = vmatprep.subr.mxu0 0.0
    %398 = vmatpush1.msra.mxu0 0.0
    %399 = vmatprep.subr.mxu0 0.0
    %400 = vmatpush1.msra.mxu0 0.0
    %401 = vmatprep.subr.mxu0 0.0
    %402 = vmatpush1.msra.mxu0 0.0
    %403 = vmatprep.subr.mxu0 0.0
    %404 = vmatpush1.msra.mxu0 0.0
    %405 = vmatprep.subr.mxu0 0.0
    %406 = vmatpush1.msra.mxu0 0.0
    %407 = vmatprep.subr.mxu0 0.0
    %408 = vmatpush1.msra.mxu0 0.0
    %409 = vmatprep.subr.mxu0 0.0
    %410 = vmatpush1.msra.mxu0 0.0
    %411 = vmatprep.subr.mxu0 0.0
    %412 = vmatpush1.msra.mxu0 0.0
    %413 = vmatprep.subr.mxu0 0.0
    %414 = vmatpush1.msra.mxu0 0.0
    %415 = vmatprep.subr.mxu0 0.0
    %416 = vmatpush1.msra.mxu0 0.0
    %417 = vmatprep.subr.mxu0 0.0
    %418 = vmatpush1.msra.mxu0 0.0
    %419 = vmatprep.subr.mxu0 0.0
    %420 = vmatpush1.msra.mxu0 0.0
    %421 = vmatprep.subr.mxu0 0.0
    %422 = vmatpush1.msra.mxu0 0.0
    %423 = vmatprep.subr.mxu0 0.0
    %424 = vmatpush1.msra.mxu0 0.0
    %425 = vmatprep.subr.mxu0 0.0
    %426 = vmatpush1.msra.mxu0 0.0
    %427 = vmatprep.subr.mxu0 0.0
    %428 = vmatpush1.msra.mxu0 0.0
    %429 = vmatprep.subr.mxu0 0.0
    %430 = vmatpush1.msra.mxu0 0.0
    %431 = vmatprep.subr.mxu0 0.0
    %432 = vmatpush1.msra.mxu0 0.0
    %433 = vmatprep.subr.mxu0 0.0
    %434 = vmatpush1.msra.mxu0 0.0
    %435 = vmatprep.subr.mxu0 0.0
    %436 = vmatpush1.msra.mxu0 0.0
    %437 = vmatprep.subr.mxu0 0.0
    %438 = vmatpush1.msra.mxu0 0.0
    %439 = vmatprep.subr.mxu0 0.0
    %440 = vmatpush1.msra.mxu0 0.0
    %441 = vmatprep.subr.mxu0 0.0
    %442 = vmatpush1.msra.mxu0 0.0
    %443 = vmatprep.subr.mxu0 0.0
    %444 = vmatpush1.msra.mxu0 0.0
    %445 = vmatprep.subr.mxu0 0.0
    %446 = vmatpush1.msra.mxu0 0.0
    %447 = vmatprep.subr.mxu0 0.0
    %448 = vmatpush1.msra.mxu0 0.0
    %449 = vmatprep.subr.mxu0 0.0
    %450 = vmatpush1.msra.mxu0 0.0
    %451 = vmatprep.mubr.f32.mxu0 0.0
    %452 = vmatmul.mubr.f32.gmra.mrb[0].mxu0 %v385
    %v453 = vpop.f32.mrb[0].mxu0
    %v454 = vadd.f32 0.0, %v453
    %v455 = vpop.f32.mrb[0].mxu0
    %456 = vdwg.mxu0
    %v457 = vadd.f32 %v380, %v454
    %s458 = scalar_lea.vmem %s3, 64
    %v459 = vld [vmem:[%s458] sm:$0xff]
    %v460 = vld [vmem:[%s458 + $0x8] sm:$0xff]
    %v462 = vsel %vm152, %v149, 0
    %464 = vmatprep.subr.mxu0 0.0
    %465 = vmatpush1.msra.mxu0 %v459
    %466 = vmatprep.subr.mxu0 0.0
    %467 = vmatpush1.msra.mxu0 %v460
    %468 = vmatprep.subr.mxu0 0.0
    %469 = vmatpush1.msra.mxu0 0.0
    %470 = vmatprep.subr.mxu0 0.0
    %471 = vmatpush1.msra.mxu0 0.0
    %472 = vmatprep.subr.mxu0 0.0
    %473 = vmatpush1.msra.mxu0 0.0
    %474 = vmatprep.subr.mxu0 0.0
    %475 = vmatpush1.msra.mxu0 0.0
    %476 = vmatprep.subr.mxu0 0.0
    %477 = vmatpush1.msra.mxu0 0.0
    %478 = vmatprep.subr.mxu0 0.0
    %479 = vmatpush1.msra.mxu0 0.0
    %480 = vmatprep.subr.mxu0 0.0
    %481 = vmatpush1.msra.mxu0 0.0
    %482 = vmatprep.subr.mxu0 0.0
    %483 = vmatpush1.msra.mxu0 0.0
    %484 = vmatprep.subr.mxu0 0.0
    %485 = vmatpush1.msra.mxu0 0.0
    %486 = vmatprep.subr.mxu0 0.0
    %487 = vmatpush1.msra.mxu0 0.0
    %488 = vmatprep.subr.mxu0 0.0
    %489 = vmatpush1.msra.mxu0 0.0
    %490 = vmatprep.subr.mxu0 0.0
    %491 = vmatpush1.msra.mxu0 0.0
    %492 = vmatprep.subr.mxu0 0.0
    %493 = vmatpush1.msra.mxu0 0.0
    %494 = vmatprep.subr.mxu0 0.0
    %495 = vmatpush1.msra.mxu0 0.0
    %496 = vmatprep.subr.mxu0 0.0
    %497 = vmatpush1.msra.mxu0 0.0
    %498 = vmatprep.subr.mxu0 0.0
    %499 = vmatpush1.msra.mxu0 0.0
    %500 = vmatprep.subr.mxu0 0.0
    %501 = vmatpush1.msra.mxu0 0.0
    %502 = vmatprep.subr.mxu0 0.0
    %503 = vmatpush1.msra.mxu0 0.0
    %504 = vmatprep.subr.mxu0 0.0
    %505 = vmatpush1.msra.mxu0 0.0
    %506 = vmatprep.subr.mxu0 0.0
    %507 = vmatpush1.msra.mxu0 0.0
    %508 = vmatprep.subr.mxu0 0.0
    %509 = vmatpush1.msra.mxu0 0.0
    %510 = vmatprep.subr.mxu0 0.0
    %511 = vmatpush1.msra.mxu0 0.0
    %512 = vmatprep.subr.mxu0 0.0
    %513 = vmatpush1.msra.mxu0 0.0
    %514 = vmatprep.subr.mxu0 0.0
    %515 = vmatpush1.msra.mxu0 0.0
    %516 = vmatprep.subr.mxu0 0.0
    %517 = vmatpush1.msra.mxu0 0.0
    %518 = vmatprep.subr.mxu0 0.0
    %519 = vmatpush1.msra.mxu0 0.0
    %520 = vmatprep.subr.mxu0 0.0
    %521 = vmatpush1.msra.mxu0 0.0
    %522 = vmatprep.subr.mxu0 0.0
    %523 = vmatpush1.msra.mxu0 0.0
    %524 = vmatprep.subr.mxu0 0.0
    %525 = vmatpush1.msra.mxu0 0.0
    %526 = vmatprep.subr.mxu0 0.0
    %527 = vmatpush1.msra.mxu0 0.0
    %528 = vmatprep.mubr.f32.mxu0 0.0
    %529 = vmatmul.mubr.f32.gmra.mrb[0].mxu0 %v462
    %v530 = vpop.f32.mrb[0].mxu0
    %v531 = vadd.f32 0.0, %v530
    %v532 = vpop.f32.mrb[0].mxu0
    %533 = vdwg.mxu0
    %v534 = vadd.f32 %v457, %v531
    %v535 = vmax.f32 %v534, 0.0
    %s536 = scalar_lea.vmem %s0, 16
    %v537 = vld [vmem:[%s536] sm:$0xff]
    %v538 = vld [vmem:[%s536 + $0x8] sm:$0x3]
    %539 = vmatprep.subr.mxu0 0.0
    %540 = vmatpush1.msra.mxu0 %v39
    %541 = vmatprep.subr.mxu0 0.0
    %542 = vmatpush1.msra.mxu0 %v40
    %543 = vmatprep.subr.mxu0 0.0
    %544 = vmatpush1.msra.mxu0 %v41
    %545 = vmatprep.subr.mxu0 0.0
    %546 = vmatpush1.msra.mxu0 %v42
    %547 = vmatprep.subr.mxu0 0.0
    %548 = vmatpush1.msra.mxu0 %v43
    %549 = vmatprep.subr.mxu0 0.0
    %550 = vmatpush1.msra.mxu0 %v44
    %551 = vmatprep.subr.mxu0 0.0
    %552 = vmatpush1.msra.mxu0 %v45
    %553 = vmatprep.subr.mxu0 0.0
    %554 = vmatpush1.msra.mxu0 %v46
    %555 = vmatprep.subr.mxu0 0.0
    %556 = vmatpush1.msra.mxu0 %v47
    %557 = vmatprep.subr.mxu0 0.0
    %558 = vmatpush1.msra.mxu0 %v48
    %559 = vmatprep.subr.mxu0 0.0
    %560 = vmatpush1.msra.mxu0 %v49
    %561 = vmatprep.subr.mxu0 0.0
    %562 = vmatpush1.msra.mxu0 %v50
    %563 = vmatprep.subr.mxu0 0.0
    %564 = vmatpush1.msra.mxu0 %v51
    %565 = vmatprep.subr.mxu0 0.0
    %566 = vmatpush1.msra.mxu0 %v52
    %567 = vmatprep.subr.mxu0 0.0
    %568 = vmatpush1.msra.mxu0 %v53
    %569 = vmatprep.subr.mxu0 0.0
    %570 = vmatpush1.msra.mxu0 %v54
    %571 = vmatprep.subr.mxu0 0.0
    %572 = vmatpush1.msra.mxu0 0.0
    %573 = vmatprep.subr.mxu0 0.0
    %574 = vmatpush1.msra.mxu0 0.0
    %575 = vmatprep.subr.mxu0 0.0
    %576 = vmatpush1.msra.mxu0 0.0
    %577 = vmatprep.subr.mxu0 0.0
    %578 = vmatpush1.msra.mxu0 0.0
    %579 = vmatprep.subr.mxu0 0.0
    %580 = vmatpush1.msra.mxu0 0.0
    %581 = vmatprep.subr.mxu0 0.0
    %582 = vmatpush1.msra.mxu0 0.0
    %583 = vmatprep.subr.mxu0 0.0
    %584 = vmatpush1.msra.mxu0 0.0
    %585 = vmatprep.subr.mxu0 0.0
    %586 = vmatpush1.msra.mxu0 0.0
    %587 = vmatprep.subr.mxu0 0.0
    %588 = vmatpush1.msra.mxu0 0.0
    %589 = vmatprep.subr.mxu0 0.0
    %590 = vmatpush1.msra.mxu0 0.0
    %591 = vmatprep.subr.mxu0 0.0
    %592 = vmatpush1.msra.mxu0 0.0
    %593 = vmatprep.subr.mxu0 0.0
    %594 = vmatpush1.msra.mxu0 0.0
    %595 = vmatprep.subr.mxu0 0.0
    %596 = vmatpush1.msra.mxu0 0.0
    %597 = vmatprep.subr.mxu0 0.0
    %598 = vmatpush1.msra.mxu0 0.0
    %599 = vmatprep.subr.mxu0 0.0
    %600 = vmatpush1.msra.mxu0 0.0
    %601 = vmatprep.subr.mxu0 0.0
    %602 = vmatpush1.msra.mxu0 0.0
    %603 = vmatprep.mubr.f32.mxu0 0.0
    %604 = vmatmul.mubr.f32.gmra.mrb[0].mxu0 %v537
    %v605 = vpop.f32.mrb[0].mxu0
    %v606 = vadd.f32 %v63, %v605
    %v607 = vpop.f32.mrb[0].mxu0
    %608 = vmatprep.mubr.f32.mxu0 0.0
    %609 = vmatmul.mubr.f32.gmra.mrb[0].mxu0 %v538
    %v610 = vpop.f32.mrb[0].mxu0
    %v611 = vadd.f32 %v63, %v610
    %v612 = vpop.f32.mrb[0].mxu0
    %613 = vdwg.mxu0
    %v614 = vmax.f32 %v606, 0.0
    %v615 = vmax.f32 %v611, 0.0
    %v617 = vrot.slane %v614, 1
    %v619 = vmax.f32 %v614, %v617
    %v621 = vrot.slane %v615, 1
    %v623 = vmax.f32 %v615, %v621
    %v625 = vsel %vm152, %v619, 0
    %627 = vmatprep.subr.mxu0 0.0
    %628 = vmatpush1.msra.mxu0 %v150
    %629 = vmatprep.subr.mxu0 0.0
    %630 = vmatpush1.msra.mxu0 %v151
    %631 = vmatprep.subr.mxu0 0.0
    %632 = vmatpush1.msra.mxu0 0.0
    %633 = vmatprep.subr.mxu0 0.0
    %634 = vmatpush1.msra.mxu0 0.0
    %635 = vmatprep.subr.mxu0 0.0
    %636 = vmatpush1.msra.mxu0 0.0
    %637 = vmatprep.subr.mxu0 0.0
    %638 = vmatpush1.msra.mxu0 0.0
    %639 = vmatprep.subr.mxu0 0.0
    %640 = vmatpush1.msra.mxu0 0.0
    %641 = vmatprep.subr.mxu0 0.0
    %642 = vmatpush1.msra.mxu0 0.0
    %643 = vmatprep.subr.mxu0 0.0
    %644 = vmatpush1.msra.mxu0 0.0
    %645 = vmatprep.subr.mxu0 0.0
    %646 = vmatpush1.msra.mxu0 0.0
    %647 = vmatprep.subr.mxu0 0.0
    %648 = vmatpush1.msra.mxu0 0.0
    %649 = vmatprep.subr.mxu0 0.0
    %650 = vmatpush1.msra.mxu0 0.0
    %651 = vmatprep.subr.mxu0 0.0
    %652 = vmatpush1.msra.mxu0 0.0
    %653 = vmatprep.subr.mxu0 0.0
    %654 = vmatpush1.msra.mxu0 0.0
    %655 = vmatprep.subr.mxu0 0.0
    %656 = vmatpush1.msra.mxu0 0.0
    %657 = vmatprep.subr.mxu0 0.0
    %658 = vmatpush1.msra.mxu0 0.0
    %659 = vmatprep.subr.mxu0 0.0
    %660 = vmatpush1.msra.mxu0 0.0
    %661 = vmatprep.subr.mxu0 0.0
    %662 = vmatpush1.msra.mxu0 0.0
    %663 = vmatprep.subr.mxu0 0.0
    %664 = vmatpush1.msra.mxu0 0.0
    %665 = vmatprep.subr.mxu0 0.0
    %666 = vmatpush1.msra.mxu0 0.0
    %667 = vmatprep.subr.mxu0 0.0
    %668 = vmatpush1.msra.mxu0 0.0
    %669 = vmatprep.subr.mxu0 0.0
    %670 = vmatpush1.msra.mxu0 0.0
    %671 = vmatprep.subr.mxu0 0.0
    %672 = vmatpush1.msra.mxu0 0.0
    %673 = vmatprep.subr.mxu0 0.0
    %674 = vmatpush1.msra.mxu0 0.0
    %675 = vmatprep.subr.mxu0 0.0
    %676 = vmatpush1.msra.mxu0 0.0
    %677 = vmatprep.subr.mxu0 0.0
    %678 = vmatpush1.msra.mxu0 0.0
    %679 = vmatprep.subr.mxu0 0.0
    %680 = vmatpush1.msra.mxu0 0.0
    %681 = vmatprep.subr.mxu0 0.0
    %682 = vmatpush1.msra.mxu0 0.0
    %683 = vmatprep.subr.mxu0 0.0
    %684 = vmatpush1.msra.mxu0 0.0
    %685 = vmatprep.subr.mxu0 0.0
    %686 = vmatpush1.msra.mxu0 0.0
    %687 = vmatprep.subr.mxu0 0.0
    %688 = vmatpush1.msra.mxu0 0.0
    %689 = vmatprep.subr.mxu0 0.0
    %690 = vmatpush1.msra.mxu0 0.0
    %691 = vmatprep.mubr.f32.mxu0 0.0
    %692 = vmatmul.mubr.f32.gmra.mrb[0].mxu0 %v625
    %v693 = vpop.f32.mrb[0].mxu0
    %v694 = vadd.f32 0.0, %v693
    %v695 = vpop.f32.mrb[0].mxu0
    %696 = vdwg.mxu0
    %v697 = vadd.f32 %v56, %v694
    %v698 = vrot.slane %v619, 2
    %v699 = vsel %vm152, %v698, 0
    %701 = vmatprep.subr.mxu0 0.0
    %702 = vmatpush1.msra.mxu0 %v228
    %703 = vmatprep.subr.mxu0 0.0
    %704 = vmatpush1.msra.mxu0 %v229
    %705 = vmatprep.subr.mxu0 0.0
    %706 = vmatpush1.msra.mxu0 0.0
    %707 = vmatprep.subr.mxu0 0.0
    %708 = vmatpush1.msra.mxu0 0.0
    %709 = vmatprep.subr.mxu0 0.0
    %710 = vmatpush1.msra.mxu0 0.0
    %711 = vmatprep.subr.mxu0 0.0
    %712 = vmatpush1.msra.mxu0 0.0
    %713 = vmatprep.subr.mxu0 0.0
    %714 = vmatpush1.msra.mxu0 0.0
    %715 = vmatprep.subr.mxu0 0.0
    %716 = vmatpush1.msra.mxu0 0.0
    %717 = vmatprep.subr.mxu0 0.0
    %718 = vmatpush1.msra.mxu0 0.0
    %719 = vmatprep.subr.mxu0 0.0
    %720 = vmatpush1.msra.mxu0 0.0
    %721 = vmatprep.subr.mxu0 0.0
    %722 = vmatpush1.msra.mxu0 0.0
    %723 = vmatprep.subr.mxu0 0.0
    %724 = vmatpush1.msra.mxu0 0.0
    %725 = vmatprep.subr.mxu0 0.0
    %726 = vmatpush1.msra.mxu0 0.0
    %727 = vmatprep.subr.mxu0 0.0
    %728 = vmatpush1.msra.mxu0 0.0
    %729 = vmatprep.subr.mxu0 0.0
    %730 = vmatpush1.msra.mxu0 0.0
    %731 = vmatprep.subr.mxu0 0.0
    %732 = vmatpush1.msra.mxu0 0.0
    %733 = vmatprep.subr.mxu0 0.0
    %734 = vmatpush1.msra.mxu0 0.0
    %735 = vmatprep.subr.mxu0 0.0
    %736 = vmatpush1.msra.mxu0 0.0
    %737 = vmatprep.subr.mxu0 0.0
    %738 = vmatpush1.msra.mxu0 0.0
    %739 = vmatprep.subr.mxu0 0.0
    %740 = vmatpush1.msra.mxu0 0.0
    %741 = vmatprep.subr.mxu0 0.0
    %742 = vmatpush1.msra.mxu0 0.0
    %743 = vmatprep.subr.mxu0 0.0
    %744 = vmatpush1.msra.mxu0 0.0
    %745 = vmatprep.subr.mxu0 0.0
    %746 = vmatpush1.msra.mxu0 0.0
    %747 = vmatprep.subr.mxu0 0.0
    %748 = vmatpush1.msra.mxu0 0.0
    %749 = vmatprep.subr.mxu0 0.0
    %750 = vmatpush1.msra.mxu0 0.0
    %751 = vmatprep.subr.mxu0 0.0
    %752 = vmatpush1.msra.mxu0 0.0
    %753 = vmatprep.subr.mxu0 0.0
    %754 = vmatpush1.msra.mxu0 0.0
    %755 = vmatprep.subr.mxu0 0.0
    %756 = vmatpush1.msra.mxu0 0.0
    %757 = vmatprep.subr.mxu0 0.0
    %758 = vmatpush1.msra.mxu0 0.0
    %759 = vmatprep.subr.mxu0 0.0
    %760 = vmatpush1.msra.mxu0 0.0
    %761 = vmatprep.subr.mxu0 0.0
    %762 = vmatpush1.msra.mxu0 0.0
    %763 = vmatprep.subr.mxu0 0.0
    %764 = vmatpush1.msra.mxu0 0.0
    %765 = vmatprep.mubr.f32.mxu0 0.0
    %766 = vmatmul.mubr.f32.gmra.mrb[0].mxu0 %v699
    %v767 = vpop.f32.mrb[0].mxu0
    %v768 = vadd.f32 0.0, %v767
    %v769 = vpop.f32.mrb[0].mxu0
    %770 = vdwg.mxu0
    %v771 = vadd.f32 %v697, %v768
    %v772 = vrot.slane %v619, 4
    %v773 = vsel %vm152, %v772, 0
    %775 = vmatprep.subr.mxu0 0.0
    %776 = vmatpush1.msra.mxu0 %v305
    %777 = vmatprep.subr.mxu0 0.0
    %778 = vmatpush1.msra.mxu0 %v306
    %779 = vmatprep.subr.mxu0 0.0
    %780 = vmatpush1.msra.mxu0 0.0
    %781 = vmatprep.subr.mxu0 0.0
    %782 = vmatpush1.msra.mxu0 0.0
    %783 = vmatprep.subr.mxu0 0.0
    %784 = vmatpush1.msra.mxu0 0.0
    %785 = vmatprep.subr.mxu0 0.0
    %786 = vmatpush1.msra.mxu0 0.0
    %787 = vmatprep.subr.mxu0 0.0
    %788 = vmatpush1.msra.mxu0 0.0
    %789 = vmatprep.subr.mxu0 0.0
    %790 = vmatpush1.msra.mxu0 0.0
    %791 = vmatprep.subr.mxu0 0.0
    %792 = vmatpush1.msra.mxu0 0.0
    %793 = vmatprep.subr.mxu0 0.0
    %794 = vmatpush1.msra.mxu0 0.0
    %795 = vmatprep.subr.mxu0 0.0
    %796 = vmatpush1.msra.mxu0 0.0
    %797 = vmatprep.subr.mxu0 0.0
    %798 = vmatpush1.msra.mxu0 0.0
    %799 = vmatprep.subr.mxu0 0.0
    %800 = vmatpush1.msra.mxu0 0.0
    %801 = vmatprep.subr.mxu0 0.0
    %802 = vmatpush1.msra.mxu0 0.0
    %803 = vmatprep.subr.mxu0 0.0
    %804 = vmatpush1.msra.mxu0 0.0
    %805 = vmatprep.subr.mxu0 0.0
    %806 = vmatpush1.msra.mxu0 0.0
    %807 = vmatprep.subr.mxu0 0.0
    %808 = vmatpush1.msra.mxu0 0.0
    %809 = vmatprep.subr.mxu0 0.0
    %810 = vmatpush1.msra.mxu0 0.0
    %811 = vmatprep.subr.mxu0 0.0
    %812 = vmatpush1.msra.mxu0 0.0
    %813 = vmatprep.subr.mxu0 0.0
    %814 = vmatpush1.msra.mxu0 0.0
    %815 = vmatprep.subr.mxu0 0.0
    %816 = vmatpush1.msra.mxu0 0.0
    %817 = vmatprep.subr.mxu0 0.0
    %818 = vmatpush1.msra.mxu0 0.0
    %819 = vmatprep.subr.mxu0 0.0
    %820 = vmatpush1.msra.mxu0 0.0
    %821 = vmatprep.subr.mxu0 0.0
    %822 = vmatpush1.msra.mxu0 0.0
    %823 = vmatprep.subr.mxu0 0.0
    %824 = vmatpush1.msra.mxu0 0.0
    %825 = vmatprep.subr.mxu0 0.0
    %826 = vmatpush1.msra.mxu0 0.0
    %827 = vmatprep.subr.mxu0 0.0
    %828 = vmatpush1.msra.mxu0 0.0
    %829 = vmatprep.subr.mxu0 0.0
    %830 = vmatpush1.msra.mxu0 0.0
    %831 = vmatprep.subr.mxu0 0.0
    %832 = vmatpush1.msra.mxu0 0.0
    %833 = vmatprep.subr.mxu0 0.0
    %834 = vmatpush1.msra.mxu0 0.0
    %835 = vmatprep.subr.mxu0 0.0
    %836 = vmatpush1.msra.mxu0 0.0
    %837 = vmatprep.subr.mxu0 0.0
    %838 = vmatpush1.msra.mxu0 0.0
    %839 = vmatprep.mubr.f32.mxu0 0.0
    %840 = vmatmul.mubr.f32.gmra.mrb[0].mxu0 %v773
    %v841 = vpop.f32.mrb[0].mxu0
    %v842 = vadd.f32 0.0, %v841
    %v843 = vpop.f32.mrb[0].mxu0
    %844 = vdwg.mxu0
    %v845 = vadd.f32 %v771, %v842
    %v846 = vrot.slane %v619, 6
    %v847 = vsel %vm152, %v846, 0
    %849 = vmatprep.subr.mxu0 0.0
    %850 = vmatpush1.msra.mxu0 %v382
    %851 = vmatprep.subr.mxu0 0.0
    %852 = vmatpush1.msra.mxu0 %v383
    %853 = vmatprep.subr.mxu0 0.0
    %854 = vmatpush1.msra.mxu0 0.0
    %855 = vmatprep.subr.mxu0 0.0
    %856 = vmatpush1.msra.mxu0 0.0
    %857 = vmatprep.subr.mxu0 0.0
    %858 = vmatpush1.msra.mxu0 0.0
    %859 = vmatprep.subr.mxu0 0.0
    %860 = vmatpush1.msra.mxu0 0.0
    %861 = vmatprep.subr.mxu0 0.0
    %862 = vmatpush1.msra.mxu0 0.0
    %863 = vmatprep.subr.mxu0 0.0
    %864 = vmatpush1.msra.mxu0 0.0
    %865 = vmatprep.subr.mxu0 0.0
    %866 = vmatpush1.msra.mxu0 0.0
    %867 = vmatprep.subr.mxu0 0.0
    %868 = vmatpush1.msra.mxu0 0.0
    %869 = vmatprep.subr.mxu0 0.0
    %870 = vmatpush1.msra.mxu0 0.0
    %871 = vmatprep.subr.mxu0 0.0
    %872 = vmatpush1.msra.mxu0 0.0
    %873 = vmatprep.subr.mxu0 0.0
    %874 = vmatpush1.msra.mxu0 0.0
    %875 = vmatprep.subr.mxu0 0.0
    %876 = vmatpush1.msra.mxu0 0.0
    %877 = vmatprep.subr.mxu0 0.0
    %878 = vmatpush1.msra.mxu0 0.0
    %879 = vmatprep.subr.mxu0 0.0
    %880 = vmatpush1.msra.mxu0 0.0
    %881 = vmatprep.subr.mxu0 0.0
    %882 = vmatpush1.msra.mxu0 0.0
    %883 = vmatprep.subr.mxu0 0.0
    %884 = vmatpush1.msra.mxu0 0.0
    %885 = vmatprep.subr.mxu0 0.0
    %886 = vmatpush1.msra.mxu0 0.0
    %887 = vmatprep.subr.mxu0 0.0
    %888 = vmatpush1.msra.mxu0 0.0
    %889 = vmatprep.subr.mxu0 0.0
    %890 = vmatpush1.msra.mxu0 0.0
    %891 = vmatprep.subr.mxu0 0.0
    %892 = vmatpush1.msra.mxu0 0.0
    %893 = vmatprep.subr.mxu0 0.0
    %894 = vmatpush1.msra.mxu0 0.0
    %895 = vmatprep.subr.mxu0 0.0
    %896 = vmatpush1.msra.mxu0 0.0
    %897 = vmatprep.subr.mxu0 0.0
    %898 = vmatpush1.msra.mxu0 0.0
    %899 = vmatprep.subr.mxu0 0.0
    %900 = vmatpush1.msra.mxu0 0.0
    %901 = vmatprep.subr.mxu0 0.0
    %902 = vmatpush1.msra.mxu0 0.0
    %903 = vmatprep.subr.mxu0 0.0
    %904 = vmatpush1.msra.mxu0 0.0
    %905 = vmatprep.subr.mxu0 0.0
    %906 = vmatpush1.msra.mxu0 0.0
    %907 = vmatprep.subr.mxu0 0.0
    %908 = vmatpush1.msra.mxu0 0.0
    %909 = vmatprep.subr.mxu0 0.0
    %910 = vmatpush1.msra.mxu0 0.0
    %911 = vmatprep.subr.mxu0 0.0
    %912 = vmatpush1.msra.mxu0 0.0
    %913 = vmatprep.mubr.f32.mxu0 0.0
    %914 = vmatmul.mubr.f32.gmra.mrb[0].mxu0 %v847
    %v915 = vpop.f32.mrb[0].mxu0
    %v916 = vadd.f32 0.0, %v915
    %v917 = vpop.f32.mrb[0].mxu0
    %918 = vdwg.mxu0
    %v919 = vadd.f32 %v845, %v916
    %v921 = vsel %vm152, %v623, 0
    %923 = vmatprep.subr.mxu0 0.0
    %924 = vmatpush1.msra.mxu0 %v459
    %925 = vmatprep.subr.mxu0 0.0
    %926 = vmatpush1.msra.mxu0 %v460
    %927 = vmatprep.subr.mxu0 0.0
    %928 = vmatpush1.msra.mxu0 0.0
    %929 = vmatprep.subr.mxu0 0.0
    %930 = vmatpush1.msra.mxu0 0.0
    %931 = vmatprep.subr.mxu0 0.0
    %932 = vmatpush1.msra.mxu0 0.0
    %933 = vmatprep.subr.mxu0 0.0
    %934 = vmatpush1.msra.mxu0 0.0
    %935 = vmatprep.subr.mxu0 0.0
    %936 = vmatpush1.msra.mxu0 0.0
    %937 = vmatprep.subr.mxu0 0.0
    %938 = vmatpush1.msra.mxu0 0.0
    %939 = vmatprep.subr.mxu0 0.0
    %940 = vmatpush1.msra.mxu0 0.0
    %941 = vmatprep.subr.mxu0 0.0
    %942 = vmatpush1.msra.mxu0 0.0
    %943 = vmatprep.subr.mxu0 0.0
    %944 = vmatpush1.msra.mxu0 0.0
    %945 = vmatprep.subr.mxu0 0.0
    %946 = vmatpush1.msra.mxu0 0.0
    %947 = vmatprep.subr.mxu0 0.0
    %948 = vmatpush1.msra.mxu0 0.0
    %949 = vmatprep.subr.mxu0 0.0
    %950 = vmatpush1.msra.mxu0 0.0
    %951 = vmatprep.subr.mxu0 0.0
    %952 = vmatpush1.msra.mxu0 0.0
    %953 = vmatprep.subr.mxu0 0.0
    %954 = vmatpush1.msra.mxu0 0.0
    %955 = vmatprep.subr.mxu0 0.0
    %956 = vmatpush1.msra.mxu0 0.0
    %957 = vmatprep.subr.mxu0 0.0
    %958 = vmatpush1.msra.mxu0 0.0
    %959 = vmatprep.subr.mxu0 0.0
    %960 = vmatpush1.msra.mxu0 0.0
    %961 = vmatprep.subr.mxu0 0.0
    %962 = vmatpush1.msra.mxu0 0.0
    %963 = vmatprep.subr.mxu0 0.0
    %964 = vmatpush1.msra.mxu0 0.0
    %965 = vmatprep.subr.mxu0 0.0
    %966 = vmatpush1.msra.mxu0 0.0
    %967 = vmatprep.subr.mxu0 0.0
    %968 = vmatpush1.msra.mxu0 0.0
    %969 = vmatprep.subr.mxu0 0.0
    %970 = vmatpush1.msra.mxu0 0.0
    %971 = vmatprep.subr.mxu0 0.0
    %972 = vmatpush1.msra.mxu0 0.0
    %973 = vmatprep.subr.mxu0 0.0
    %974 = vmatpush1.msra.mxu0 0.0
    %975 = vmatprep.subr.mxu0 0.0
    %976 = vmatpush1.msra.mxu0 0.0
    %977 = vmatprep.subr.mxu0 0.0
    %978 = vmatpush1.msra.mxu0 0.0
    %979 = vmatprep.subr.mxu0 0.0
    %980 = vmatpush1.msra.mxu0 0.0
    %981 = vmatprep.subr.mxu0 0.0
    %982 = vmatpush1.msra.mxu0 0.0
    %983 = vmatprep.subr.mxu0 0.0
    %984 = vmatpush1.msra.mxu0 0.0
    %985 = vmatprep.subr.mxu0 0.0
    %986 = vmatpush1.msra.mxu0 0.0
    %987 = vmatprep.mubr.f32.mxu0 0.0
    %988 = vmatmul.mubr.f32.gmra.mrb[0].mxu0 %v921
    %v989 = vpop.f32.mrb[0].mxu0
    %v990 = vadd.f32 0.0, %v989
    %v991 = vpop.f32.mrb[0].mxu0
    %992 = vdwg.mxu0
    %v993 = vadd.f32 %v919, %v990
    %v994 = vmax.f32 %v993, 0.0
    %v996 = vlaneseq
    %v997 = vshrl.u32 %v996, 7
    %v998 = vsub.s32 0, %v997
    %v999 = vrot.slane %v994, %v998
    %vm1001 = vcmask 1040384
    %v1002 = vsel %vm1001, %v535, %v999
    %v1003 = vmax.f32 %v1002, 0.0
    %v1004 = vld [vmem:[%s5] sm:$0xff]
    %v1005 = vld [vmem:[%s5 + $0x8] sm:$0xff]
    %v1006 = vld [vmem:[%s5 + $0x10] sm:$0xff]
    %v1007 = vld [vmem:[%s5 + $0x18] sm:$0xff]
    %v1008 = vld [vmem:[%s6] sm:$0x1]
    %v1010 = vlaneseq
    %v1011 = vshrl.u32 %v1010, 7
    %v1012 = vsub.s32 0, %v1011
    %v1013 = vrot.slane %v1008, %v1012
    %vm1015 = vcmask 261120
    %v1017 = vsel %vm1015, %v1003, 0
    %1019 = vmatprep.subr.mxu0 0.0
    %1020 = vmatpush1.msra.mxu0 %v1004
    %1021 = vmatprep.subr.mxu0 0.0
    %1022 = vmatpush1.msra.mxu0 %v1005
    %1023 = vmatprep.subr.mxu0 0.0
    %1024 = vmatpush1.msra.mxu0 %v1006
    %1025 = vmatprep.subr.mxu0 0.0
    %1026 = vmatpush1.msra.mxu0 %v1007
    %1027 = vmatprep.subr.mxu0 0.0
    %1028 = vmatpush1.msra.mxu0 0.0
    %1029 = vmatprep.subr.mxu0 0.0
    %1030 = vmatpush1.msra.mxu0 0.0
    %1031 = vmatprep.subr.mxu0 0.0
    %1032 = vmatpush1.msra.mxu0 0.0
    %1033 = vmatprep.subr.mxu0 0.0
    %1034 = vmatpush1.msra.mxu0 0.0
    %1035 = vmatprep.subr.mxu0 0.0
    %1036 = vmatpush1.msra.mxu0 0.0
    %1037 = vmatprep.subr.mxu0 0.0
    %1038 = vmatpush1.msra.mxu0 0.0
    %1039 = vmatprep.subr.mxu0 0.0
    %1040 = vmatpush1.msra.mxu0 0.0
    %1041 = vmatprep.subr.mxu0 0.0
    %1042 = vmatpush1.msra.mxu0 0.0
    %1043 = vmatprep.subr.mxu0 0.0
    %1044 = vmatpush1.msra.mxu0 0.0
    %1045 = vmatprep.subr.mxu0 0.0
    %1046 = vmatpush1.msra.mxu0 0.0
    %1047 = vmatprep.subr.mxu0 0.0
    %1048 = vmatpush1.msra.mxu0 0.0
    %1049 = vmatprep.subr.mxu0 0.0
    %1050 = vmatpush1.msra.mxu0 0.0
    %1051 = vmatprep.subr.mxu0 0.0
    %1052 = vmatpush1.msra.mxu0 0.0
    %1053 = vmatprep.subr.mxu0 0.0
    %1054 = vmatpush1.msra.mxu0 0.0
    %1055 = vmatprep.subr.mxu0 0.0
    %1056 = vmatpush1.msra.mxu0 0.0
    %1057 = vmatprep.subr.mxu0 0.0
    %1058 = vmatpush1.msra.mxu0 0.0
    %1059 = vmatprep.subr.mxu0 0.0
    %1060 = vmatpush1.msra.mxu0 0.0
    %1061 = vmatprep.subr.mxu0 0.0
    %1062 = vmatpush1.msra.mxu0 0.0
    %1063 = vmatprep.subr.mxu0 0.0
    %1064 = vmatpush1.msra.mxu0 0.0
    %1065 = vmatprep.subr.mxu0 0.0
    %1066 = vmatpush1.msra.mxu0 0.0
    %1067 = vmatprep.subr.mxu0 0.0
    %1068 = vmatpush1.msra.mxu0 0.0
    %1069 = vmatprep.subr.mxu0 0.0
    %1070 = vmatpush1.msra.mxu0 0.0
    %1071 = vmatprep.subr.mxu0 0.0
    %1072 = vmatpush1.msra.mxu0 0.0
    %1073 = vmatprep.subr.mxu0 0.0
    %1074 = vmatpush1.msra.mxu0 0.0
    %1075 = vmatprep.subr.mxu0 0.0
    %1076 = vmatpush1.msra.mxu0 0.0
    %1077 = vmatprep.subr.mxu0 0.0
    %1078 = vmatpush1.msra.mxu0 0.0
    %1079 = vmatprep.subr.mxu0 0.0
    %1080 = vmatpush1.msra.mxu0 0.0
    %1081 = vmatprep.subr.mxu0 0.0
    %1082 = vmatpush1.msra.mxu0 0.0
    %1083 = vmatprep.mubr.f32.mxu0 0.0
    %1084 = vmatmul.mubr.f32.gmra.mrb[0].mxu0 %v1017
    %v1085 = vpop.f32.mrb[0].mxu0
    %v1086 = vadd.f32 %v1013, %v1085
    %v1087 = vpop.f32.mrb[0].mxu0
    %1088 = vdwg.mxu0
    %v1089 = vmax.f32 %v1086, 0.0
    %v1090 = vld [vmem:[%s7] sm:$0xff]
    %v1091 = vld [vmem:[%s7 + $0x8] sm:$0xff]
    %v1092 = vld [vmem:[%s7 + $0x10] sm:$0xff]
    %v1093 = vld [vmem:[%s7 + $0x18] sm:$0xff]
    %v1094 = vld [vmem:[%s8] sm:$0x1]
    %v1096 = vlaneseq
    %v1097 = vshrl.u32 %v1096, 7
    %v1098 = vsub.s32 0, %v1097
    %v1099 = vrot.slane %v1094, %v1098
    %v1102 = vsel %vm1015, %v1089, 0
    %1104 = vmatprep.subr.mxu0 0.0
    %1105 = vmatpush1.msra.mxu0 %v1090
    %1106 = vmatprep.subr.mxu0 0.0
    %1107 = vmatpush1.msra.mxu0 %v1091
    %1108 = vmatprep.subr.mxu0 0.0
    %1109 = vmatpush1.msra.mxu0 %v1092
    %1110 = vmatprep.subr.mxu0 0.0
    %1111 = vmatpush1.msra.mxu0 %v1093
    %1112 = vmatprep.subr.mxu0 0.0
    %1113 = vmatpush1.msra.mxu0 0.0
    %1114 = vmatprep.subr.mxu0 0.0
    %1115 = vmatpush1.msra.mxu0 0.0
    %1116 = vmatprep.subr.mxu0 0.0
    %1117 = vmatpush1.msra.mxu0 0.0
    %1118 = vmatprep.subr.mxu0 0.0
    %1119 = vmatpush1.msra.mxu0 0.0
    %1120 = vmatprep.subr.mxu0 0.0
    %1121 = vmatpush1.msra.mxu0 0.0
    %1122 = vmatprep.subr.mxu0 0.0
    %1123 = vmatpush1.msra.mxu0 0.0
    %1124 = vmatprep.subr.mxu0 0.0
    %1125 = vmatpush1.msra.mxu0 0.0
    %1126 = vmatprep.subr.mxu0 0.0
    %1127 = vmatpush1.msra.mxu0 0.0
    %1128 = vmatprep.subr.mxu0 0.0
    %1129 = vmatpush1.msra.mxu0 0.0
    %1130 = vmatprep.subr.mxu0 0.0
    %1131 = vmatpush1.msra.mxu0 0.0
    %1132 = vmatprep.subr.mxu0 0.0
    %1133 = vmatpush1.msra.mxu0 0.0
    %1134 = vmatprep.subr.mxu0 0.0
    %1135 = vmatpush1.msra.mxu0 0.0
    %1136 = vmatprep.subr.mxu0 0.0
    %1137 = vmatpush1.msra.mxu0 0.0
    %1138 = vmatprep.subr.mxu0 0.0
    %1139 = vmatpush1.msra.mxu0 0.0
    %1140 = vmatprep.subr.mxu0 0.0
    %1141 = vmatpush1.msra.mxu0 0.0
    %1142 = vmatprep.subr.mxu0 0.0
    %1143 = vmatpush1.msra.mxu0 0.0
    %1144 = vmatprep.subr.mxu0 0.0
    %1145 = vmatpush1.msra.mxu0 0.0
    %1146 = vmatprep.subr.mxu0 0.0
    %1147 = vmatpush1.msra.mxu0 0.0
    %1148 = vmatprep.subr.mxu0 0.0
    %1149 = vmatpush1.msra.mxu0 0.0
    %1150 = vmatprep.subr.mxu0 0.0
    %1151 = vmatpush1.msra.mxu0 0.0
    %1152 = vmatprep.subr.mxu0 0.0
    %1153 = vmatpush1.msra.mxu0 0.0
    %1154 = vmatprep.subr.mxu0 0.0
    %1155 = vmatpush1.msra.mxu0 0.0
    %1156 = vmatprep.subr.mxu0 0.0
    %1157 = vmatpush1.msra.mxu0 0.0
    %1158 = vmatprep.subr.mxu0 0.0
    %1159 = vmatpush1.msra.mxu0 0.0
    %1160 = vmatprep.subr.mxu0 0.0
    %1161 = vmatpush1.msra.mxu0 0.0
    %1162 = vmatprep.subr.mxu0 0.0
    %1163 = vmatpush1.msra.mxu0 0.0
    %1164 = vmatprep.subr.mxu0 0.0
    %1165 = vmatpush1.msra.mxu0 0.0
    %1166 = vmatprep.subr.mxu0 0.0
    %1167 = vmatpush1.msra.mxu0 0.0
    %1168 = vmatprep.mubr.f32.mxu0 0.0
    %1169 = vmatmul.mubr.f32.gmra.mrb[0].mxu0 %v1102
    %v1170 = vpop.f32.mrb[0].mxu0
    %v1171 = vadd.f32 %v1099, %v1170
    %v1172 = vpop.f32.mrb[0].mxu0
    %1173 = vdwg.mxu0
    %vm1174 = vcmask 9216
    %v1175 = vsel %vm1174, %v1171, -inf
    %1176 = vmax.xlane.f32.xlu0 %v1175
    %v1177 = vpop.xlane.xlu0 %1176
    %v1178 = vsub.f32 %v1171, %v1177
    %v1179 = vmul.f32 %v1178, 1.442695
    %v1180 = vpow.pop %v1179
    %v1181 = vsel %vm1174, %v1180, 0.0
    %1182 = vadd.xlane.f32.xlu0 %v1181
    %v1183 = vpop.xlane.xlu0 %1182
    %v1184 = vlog2.pop %v1183
    %v1185 = vmul.f32 %v1184, 0.6931472
    %v1186 = vadd.f32 %v1185, %v1177
    %v1187 = vsub.f32 %v1171, %v1186
    %1188 = vst.msk [vmem:[#allocation2] sm:$0x3] %vm1174, %v1187
    %v1189 = vlaneseq
    %v1190 = vand.u32 %v1189, 127
    %v1191 = vld [vmem:[%s9] sm:$0x3]
    %1192 = vset.pattern.permute.xlu0 0
    %1193 = vperm.xlu0 %1192, %v1191
    %v1194 = vpop.permute.xlu0 %1193
    %vm1195 = vcmp.eq.s32.totalorder %v1190, %v1194
    %v1196 = vsel %vm1195, %v1187, 0.0
    %v1197 = vsel %vm1174, %v1196, 0.0
    %1198 = vadd.xlane.f32.xlu0 %v1197
    %v1199 = vpop.xlane.xlu0 %1198
    %v1200 = vsub.f32 0.0, %v1199
    %vm1201 = vcmask 1041408
    %v1202 = vsel %vm1201, %v1200, 0.0
    %v1203 = vrot.slane %v1202, 4
    %v1204 = vadd.f32 %v1202, %v1203
    %v1205 = vrot.slane %v1204, 2
    %v1206 = vadd.f32 %v1204, %v1205
    %v1207 = vrot.slane %v1206, 1
    %v1208 = vadd.f32 %v1206, %v1207
    %v1209 = vrcp.pop 2.0
    %v1210 = vmul.f32 %v1208, %v1209
    %vm1211 = vcmask 0
    %1212 = vst.msk [vmem:[#allocation4] sm:$0x1] %vm1211, %v1210
    // Predicated region
    $region42: #{classifier_forward.3} parent=1 // pred_check
      _
    $region43: #{classifier_forward.3} parent=1 // pred_check_branch
      %1214 = sbr.rel (0) target = $region45
    $region44: #{classifier_forward.3} parent=1 // pred_region
      %s1216 = ssub.s32 32, 32
      %1217 = vsyncadd [#allocation3], %s1216
      %s1219 = sshll.u32 [#allocation2], 4
      %s1220 = int_to_ptr.vmem [resolvable:$true] %s1219
      %1222 = dma.vmem_to_hbm [thread:$0]  %s1220, 32, %s10, [#allocation3]
    $region45: #{classifier_forward.3} parent=1 // pred_fallthru
      _
    // Predicated region
    $region46: #{classifier_forward.3} parent=1 // pred_check
      _
    $region47: #{classifier_forward.3} parent=1 // pred_check_branch
      %1224 = sbr.rel (0) target = $region49
    $region48: #{classifier_forward.3} parent=1 // pred_region
      %s1226 = ssub.s32 16, 16
      %1227 = vsyncadd [#allocation5], %s1226
      %s1229 = sshll.u32 [#allocation4], 4
      %s1230 = int_to_ptr.vmem [resolvable:$true] %s1229
      %1232 = dma.vmem_to_hbm [thread:$0]  %s1230, 16, %s11, [#allocation5]
    $region49: #{classifier_forward.3} parent=1 // pred_fallthru
      _
    // Predicated region
    $region50: #{classifier_forward.3} parent=1 // pred_check
      _
    $region51: #{classifier_forward.3} parent=1 // pred_check_branch
      %1234 = sbr.rel (0) target = $region53
    $region52: #{classifier_forward.3} parent=1 // pred_region
      %1235 = dma.done [#allocation3], 32
    $region53: #{classifier_forward.3} parent=1 // pred_fallthru
      _
    // Predicated region
    $region54: #{classifier_forward.3} parent=1 // pred_check
      _
    $region55: #{classifier_forward.3} parent=1 // pred_check_branch
      %1237 = sbr.rel (0) target = $region57
    $region56: #{classifier_forward.3} parent=1 // pred_region
      %1238 = dma.done [#allocation5], 16
    $region57: #{classifier_forward.3} parent=1 // pred_fallthru
      _
    %1239 = vsyncpa [#allocation3], 1
    %1240 = vsyncpa [#allocation5], 1

</llo_original>
